<compile_context>
chip_gen: v7x
topology: tpu7x:2x2x1
jax: 0.10.0
libtpu: 0.0.40
codegen_flags: <defaults>
</compile_context>

<pallas_src>
import math
import jax
import jax.numpy as jnp
from jax.experimental import pallas as pl
from jax.experimental.pallas import tpu as pltpu

D_MODEL = 32
NUM_HEADS = 4
HEAD_DIM = D_MODEL // NUM_HEADS
LN_EPS = 1e-5
ATTN_SCALE = 1.0 / math.sqrt(HEAD_DIM)


def _cross_head_attn_kernel(x_ref, w_ref, vec_ref, o_ref):
    B, S, D = o_ref.shape
    H, hd = NUM_HEADS, HEAD_DIM
    BS = B * S

    x = x_ref[...]                         # (B, S, D)
    w_all = w_ref[...]                     # (D, 4D): [:, :3D] = in_proj^T, [:, 3D:] = out_proj^T
    vec = vec_ref[...]                     # (2, 3D): row0 = b_qkv, row1 = [b_out | gamma | beta]

    w_qkv = w_all[:, 0:3 * D]              # (D, 3D)
    w_out_t = w_all[:, 3 * D:4 * D]        # (D, D)
    b_qkv = vec[0:1, :]                    # (1, 3D)
    b_out = vec[1:2, 0:D]                  # (1, D)
    gamma = vec[1:2, D:2 * D]              # (1, D)
    beta = vec[1:2, 2 * D:3 * D]           # (1, D)

    # Fused QKV projection: one (B*S, D) @ (D, 3D) MXU push, shared (unreplicated) weight.
    x2 = x.reshape(BS, D)
    qkv = jnp.dot(x2, w_qkv, preferred_element_type=jnp.float32) + b_qkv   # (BS, 3D)

    # Per-head attention (static Python loop, batched over B); heads come from
    # static lane slices of the fused qkv slab.
    attn2 = None
    for h in range(H):
        q = qkv[:, h * hd:(h + 1) * hd].reshape(B, S, hd)
        k = qkv[:, D + h * hd:D + (h + 1) * hd].reshape(B, S, hd)
        v = qkv[:, 2 * D + h * hd:2 * D + (h + 1) * hd].reshape(B, S, hd)

        s = jnp.einsum('bse,bte->bst', q, k,
                       preferred_element_type=jnp.float32) * ATTN_SCALE    # (B, S, S)
        s = s - jnp.max(s, axis=-1, keepdims=True)
        p = jnp.exp(s)
        p = p / jnp.sum(p, axis=-1, keepdims=True)                          # exact reciprocal
        # TODO(synk): attention-weight / output dropout (p=0.1) are identity in eval mode; not applied.
        ctx = jnp.einsum('bst,bte->bse', p, v,
                         preferred_element_type=jnp.float32)                # (B, S, hd)

        # Per-head row block of W_out^T; summing over heads == concat(ctx_h) @ W_out^T.
        proj = jnp.dot(ctx.reshape(BS, hd), w_out_t[h * hd:(h + 1) * hd, :],
                       preferred_element_type=jnp.float32)                  # (BS, D)
        attn2 = proj if attn2 is None else attn2 + proj

    attn2 = attn2 + b_out                                                   # (BS, D)

    # Residual + LayerNorm over the model dim.
    y = x2 + attn2
    mu = jnp.mean(y, axis=-1, keepdims=True)
    var = jnp.mean((y - mu) * (y - mu), axis=-1, keepdims=True)             # biased var (PyTorch LN)
    out = (y - mu) * jax.lax.rsqrt(var + LN_EPS) * gamma + beta
    o_ref[...] = out.reshape(B, S, D).astype(o_ref.dtype)


def pack_params(params):
    """One-time parameter re-layout (call at init / whenever weights change).

    Returns:
      w_all: (D, 4D) = concat([w_in.T, w_out.T], axis=1)   -> (32, 128), lane-dense
      vec:   (2, 3D) = [b_in ; concat(b_out, gamma, beta)]
    """
    w_in, b_in, w_out, b_out, gamma, beta = params
    w_all = jnp.concatenate([w_in.T, w_out.T], axis=1).astype(jnp.float32)
    vec = jnp.stack([b_in, jnp.concatenate([b_out, gamma, beta])]).astype(jnp.float32)
    return w_all, vec


def cross_head_attention(x_sbd, w_all, vec):
    """x_sbd: (S, B, D) float32, seq-first like nn.MultiheadAttention's default layout."""
    S, B, D = x_sbd.shape
    assert D == D_MODEL

    x_bsd = jnp.transpose(x_sbd, (1, 0, 2))                    # (B, S, D), batch-first

    out_bsd = pl.pallas_call(
        _cross_head_attn_kernel,
        out_shape=jax.ShapeDtypeStruct((B, S, D), x_sbd.dtype),
        grid=(1,),                                             # single program: whole problem in VMEM
        in_specs=[
            pl.BlockSpec((B, S, D), lambda i: (0, 0, 0)),
            pl.BlockSpec((D, 4 * D), lambda i: (0, 0)),
            pl.BlockSpec((2, 3 * D), lambda i: (0, 0)),
        ],
        out_specs=pl.BlockSpec((B, S, D), lambda i: (0, 0, 0)),
        compiler_params=pltpu.CompilerParams(
            dimension_semantics=("arbitrary",)),
    )(x_bsd, w_all, vec)

    return jnp.transpose(out_bsd, (1, 0, 2))                   # back to (S, B, D)


def init_params(key, d_model):
    # Deterministic synthetic init matching nn.MultiheadAttention / nn.LayerNorm shapes.
    k1, k2, k3, k4 = jax.random.split(key, 4)
    bound = 1.0 / math.sqrt(d_model)
    w_in = jax.random.uniform(k1, (3 * d_model, d_model), jnp.float32, -bound, bound)
    b_in = jax.random.uniform(k2, (3 * d_model,), jnp.float32, -bound, bound)
    w_out = jax.random.uniform(k3, (d_model, d_model), jnp.float32, -bound, bound)
    b_out = jax.random.uniform(k4, (d_model,), jnp.float32, -bound, bound)
    gamma = jnp.ones((d_model,), jnp.float32)
    beta = jnp.zeros((d_model,), jnp.float32)
    return (w_in, b_in, w_out, b_out, gamma, beta)


def _reference(x_sbd, params):
    # Pure-JAX reference of the same forward (eval mode) for a correctness check.
    w_in, b_in, w_out, b_out, gamma, beta = params
    S, B, D = x_sbd.shape
    x = jnp.transpose(x_sbd, (1, 0, 2))                        # (B, S, D)
    qkv = jnp.einsum('bsd,ed->bse', x, w_in) + b_in
    q, k, v = jnp.split(qkv, 3, axis=-1)

    def heads(t):
        return t.reshape(B, S, NUM_HEADS, HEAD_DIM).transpose(0, 2, 1, 3)

    qh, kh, vh = heads(q), heads(k), heads(v)
    scores = jnp.einsum('bhsd,bhtd->bhst', qh, kh) / math.sqrt(HEAD_DIM)
    p = jax.nn.softmax(scores, axis=-1)
    oh = jnp.einsum('bhst,bhtd->bhsd', p, vh)
    o = oh.transpose(0, 2, 1, 3).reshape(B, S, D)
    attn = jnp.einsum('bsd,ed->bse', o, w_out) + b_out
    y = x + attn
    mu = jnp.mean(y, axis=-1, keepdims=True)
    var = jnp.mean((y - mu) ** 2, axis=-1, keepdims=True)
    out = (y - mu) / jnp.sqrt(var + LN_EPS) * gamma + beta
    return jnp.transpose(out, (1, 0, 2))


if __name__ == "__main__":
    key = jax.random.PRNGKey(0)
    kx, kp = jax.random.split(key)
    S, B = 8, 2
    x = jax.random.normal(kx, (S, B, D_MODEL), jnp.float32)    # (seq, batch, d_model)
    params = init_params(kp, D_MODEL)

    # Pre-pack the weights ONCE (outside the per-call path).
    w_all, vec = pack_params(params)

    fwd = jax.jit(cross_head_attention)
    out = fwd(x, w_all, vec)
    out = jax.block_until_ready(out)

    ref = _reference(x, params)
    assert out.shape == (S, B, D_MODEL)
    assert jnp.allclose(out, ref, atol=1e-4, rtol=1e-4), "mismatch vs reference"
    print("KERNEL_OK")
</pallas_src>

<mosaic_0001>
module attributes {stable_mosaic.version = 11 : i64} {
  func.func @_cross_head_attn_kernel(%arg0: i32, %arg1: memref<2x8x32xf32, #tpu.memory_space<vmem>>, %arg2: memref<32x128xf32, #tpu.memory_space<vmem>>, %arg3: memref<2x96xf32, #tpu.memory_space<vmem>>, %arg4: memref<2x8x32xf32, #tpu.memory_space<vmem>>) attributes {dimension_semantics = [#tpu.dimension_semantics<arbitrary>], iteration_bounds = array<i64: 1>, scalar_prefetch = 0 : i64, scratch_operands = 0 : i64, tpu.core_type = #tpu.core_type<tc>, window_params = [{pipeline_mode = #tpu.pipeline_mode<synchronous>, transform_indices = @transform_0, window_bounds = array<i64: 2, 8, 32>}, {pipeline_mode = #tpu.pipeline_mode<synchronous>, transform_indices = @transform_1, window_bounds = array<i64: 32, 128>}, {pipeline_mode = #tpu.pipeline_mode<synchronous>, transform_indices = @transform_2, window_bounds = array<i64: 2, 96>}, {pipeline_mode = #tpu.pipeline_mode<synchronous>, transform_indices = @transform_3, window_bounds = array<i64: 2, 8, 32>}]} {
    %c0 = arith.constant 0 : index
    %c0_0 = arith.constant 0 : index
    %c0_1 = arith.constant 0 : index
    %0 = vector.load %arg1[%c0, %c0_0, %c0_1] : memref<2x8x32xf32, #tpu.memory_space<vmem>>, vector<2x8x32xf32>
    %c0_2 = arith.constant 0 : index
    %c0_3 = arith.constant 0 : index
    %1 = vector.load %arg2[%c0_2, %c0_3] : memref<32x128xf32, #tpu.memory_space<vmem>>, vector<32x128xf32>
    %c0_4 = arith.constant 0 : index
    %c0_5 = arith.constant 0 : index
    %2 = vector.load %arg3[%c0_4, %c0_5] : memref<2x96xf32, #tpu.memory_space<vmem>>, vector<2x96xf32>
    %3 = vector.extract_strided_slice %1 {offsets = [0, 0], sizes = [32, 96], strides = [1, 1]} : vector<32x128xf32> to vector<32x96xf32>
    %4 = vector.extract_strided_slice %1 {offsets = [0, 96], sizes = [32, 32], strides = [1, 1]} : vector<32x128xf32> to vector<32x32xf32>
    %5 = vector.extract_strided_slice %2 {offsets = [0, 0], sizes = [1, 96], strides = [1, 1]} : vector<2x96xf32> to vector<1x96xf32>
    %6 = vector.extract_strided_slice %2 {offsets = [1, 0], sizes = [1, 32], strides = [1, 1]} : vector<2x96xf32> to vector<1x32xf32>
    %7 = vector.extract_strided_slice %2 {offsets = [1, 32], sizes = [1, 32], strides = [1, 1]} : vector<2x96xf32> to vector<1x32xf32>
    %8 = vector.extract_strided_slice %2 {offsets = [1, 64], sizes = [1, 32], strides = [1, 1]} : vector<2x96xf32> to vector<1x32xf32>
    %9 = vector.shape_cast %0 : vector<2x8x32xf32> to vector<16x32xf32>
    %cst = arith.constant dense<0.000000e+00> : vector<16x96xf32>
    %10 = tpu.matmul %9, %3, %cst {dimension_numbers = #tpu.dot_dimension_numbers<[1], [0], [0], [1], [0, 0, 1, 1], [], []>} : vector<16x32xf32>, vector<32x96xf32>, vector<16x96xf32> -> vector<16x96xf32>
    %11 = vector.broadcast %5 : vector<1x96xf32> to vector<16x96xf32>
    %12 = arith.addf %10, %11 : vector<16x96xf32>
    %13 = vector.extract_strided_slice %12 {offsets = [0, 0], sizes = [16, 8], strides = [1, 1]} : vector<16x96xf32> to vector<16x8xf32>
    %14 = vector.shape_cast %13 : vector<16x8xf32> to vector<2x8x8xf32>
    %15 = vector.extract_strided_slice %12 {offsets = [0, 32], sizes = [16, 8], strides = [1, 1]} : vector<16x96xf32> to vector<16x8xf32>
    %16 = vector.shape_cast %15 : vector<16x8xf32> to vector<2x8x8xf32>
    %17 = vector.extract_strided_slice %12 {offsets = [0, 64], sizes = [16, 8], strides = [1, 1]} : vector<16x96xf32> to vector<16x8xf32>
    %18 = vector.shape_cast %17 : vector<16x8xf32> to vector<2x8x8xf32>
    "tpu.trace_start"() <{level = 10 : i32, message = "bse,bte->bst"}> : () -> ()
    %cst_6 = arith.constant dense<0.000000e+00> : vector<2x8x8xf32>
    %19 = tpu.matmul %14, %16, %cst_6 {dimension_numbers = #tpu.dot_dimension_numbers<[2], [2], [1], [1], [0, 0, 0, 1, 1, 1], [0], [0]>} : vector<2x8x8xf32>, vector<2x8x8xf32>, vector<2x8x8xf32> -> vector<2x8x8xf32>
    "tpu.trace_stop"() : () -> ()
    %cst_7 = arith.constant 0.353553385 : f32
    %20 = vector.broadcast %cst_7 : f32 to vector<2x8x8xf32>
    %21 = arith.mulf %19, %20 : vector<2x8x8xf32>
    %cst_8 = arith.constant dense<0xFF800000> : vector<2x8xf32>
    %22 = vector.multi_reduction <maximumf>, %21, %cst_8 [2] : vector<2x8x8xf32> to vector<2x8xf32>
    %23 = vector.shape_cast %22 : vector<2x8xf32> to vector<2x8x1xf32>
    %24 = vector.broadcast %23 : vector<2x8x1xf32> to vector<2x8x8xf32>
    %25 = arith.subf %21, %24 : vector<2x8x8xf32>
    %26 = math.exp %25 : vector<2x8x8xf32>
    %cst_9 = arith.constant dense<0.000000e+00> : vector<2x8xf32>
    %27 = vector.multi_reduction <add>, %26, %cst_9 [2] : vector<2x8x8xf32> to vector<2x8xf32>
    %28 = vector.shape_cast %27 : vector<2x8xf32> to vector<2x8x1xf32>
    %29 = vector.broadcast %28 : vector<2x8x1xf32> to vector<2x8x8xf32>
    %30 = arith.divf %26, %29 : vector<2x8x8xf32>
    "tpu.trace_start"() <{level = 10 : i32, message = "bst,bte->bse"}> : () -> ()
    %cst_10 = arith.constant dense<0.000000e+00> : vector<2x8x8xf32>
    %31 = tpu.matmul %30, %18, %cst_10 {dimension_numbers = #tpu.dot_dimension_numbers<[2], [1], [1], [2], [0, 0, 0, 1, 1, 2], [0], [0]>} : vector<2x8x8xf32>, vector<2x8x8xf32>, vector<2x8x8xf32> -> vector<2x8x8xf32>
    "tpu.trace_stop"() : () -> ()
    %32 = vector.shape_cast %31 : vector<2x8x8xf32> to vector<16x8xf32>
    %33 = vector.extract_strided_slice %4 {offsets = [0, 0], sizes = [8, 32], strides = [1, 1]} : vector<32x32xf32> to vector<8x32xf32>
    %cst_11 = arith.constant dense<0.000000e+00> : vector<16x32xf32>
    %34 = tpu.matmul %32, %33, %cst_11 {dimension_numbers = #tpu.dot_dimension_numbers<[1], [0], [0], [1], [0, 0, 1, 1], [], []>} : vector<16x8xf32>, vector<8x32xf32>, vector<16x32xf32> -> vector<16x32xf32>
    %35 = vector.extract_strided_slice %12 {offsets = [0, 8], sizes = [16, 8], strides = [1, 1]} : vector<16x96xf32> to vector<16x8xf32>
    %36 = vector.shape_cast %35 : vector<16x8xf32> to vector<2x8x8xf32>
    %37 = vector.extract_strided_slice %12 {offsets = [0, 40], sizes = [16, 8], strides = [1, 1]} : vector<16x96xf32> to vector<16x8xf32>
    %38 = vector.shape_cast %37 : vector<16x8xf32> to vector<2x8x8xf32>
    %39 = vector.extract_strided_slice %12 {offsets = [0, 72], sizes = [16, 8], strides = [1, 1]} : vector<16x96xf32> to vector<16x8xf32>
    %40 = vector.shape_cast %39 : vector<16x8xf32> to vector<2x8x8xf32>
    "tpu.trace_start"() <{level = 10 : i32, message = "bse,bte->bst"}> : () -> ()
    %cst_12 = arith.constant dense<0.000000e+00> : vector<2x8x8xf32>
    %41 = tpu.matmul %36, %38, %cst_12 {dimension_numbers = #tpu.dot_dimension_numbers<[2], [2], [1], [1], [0, 0, 0, 1, 1, 1], [0], [0]>} : vector<2x8x8xf32>, vector<2x8x8xf32>, vector<2x8x8xf32> -> vector<2x8x8xf32>
    "tpu.trace_stop"() : () -> ()
    %cst_13 = arith.constant 0.353553385 : f32
    %42 = vector.broadcast %cst_13 : f32 to vector<2x8x8xf32>
    %43 = arith.mulf %41, %42 : vector<2x8x8xf32>
    %cst_14 = arith.constant dense<0xFF800000> : vector<2x8xf32>
    %44 = vector.multi_reduction <maximumf>, %43, %cst_14 [2] : vector<2x8x8xf32> to vector<2x8xf32>
    %45 = vector.shape_cast %44 : vector<2x8xf32> to vector<2x8x1xf32>
    %46 = vector.broadcast %45 : vector<2x8x1xf32> to vector<2x8x8xf32>
    %47 = arith.subf %43, %46 : vector<2x8x8xf32>
    %48 = math.exp %47 : vector<2x8x8xf32>
    %cst_15 = arith.constant dense<0.000000e+00> : vector<2x8xf32>
    %49 = vector.multi_reduction <add>, %48, %cst_15 [2] : vector<2x8x8xf32> to vector<2x8xf32>
    %50 = vector.shape_cast %49 : vector<2x8xf32> to vector<2x8x1xf32>
    %51 = vector.broadcast %50 : vector<2x8x1xf32> to vector<2x8x8xf32>
    %52 = arith.divf %48, %51 : vector<2x8x8xf32>
    "tpu.trace_start"() <{level = 10 : i32, message = "bst,bte->bse"}> : () -> ()
    %cst_16 = arith.constant dense<0.000000e+00> : vector<2x8x8xf32>
    %53 = tpu.matmul %52, %40, %cst_16 {dimension_numbers = #tpu.dot_dimension_numbers<[2], [1], [1], [2], [0, 0, 0, 1, 1, 2], [0], [0]>} : vector<2x8x8xf32>, vector<2x8x8xf32>, vector<2x8x8xf32> -> vector<2x8x8xf32>
    "tpu.trace_stop"() : () -> ()
    %54 = vector.shape_cast %53 : vector<2x8x8xf32> to vector<16x8xf32>
    %55 = vector.extract_strided_slice %4 {offsets = [8, 0], sizes = [8, 32], strides = [1, 1]} : vector<32x32xf32> to vector<8x32xf32>
    %cst_17 = arith.constant dense<0.000000e+00> : vector<16x32xf32>
    %56 = tpu.matmul %54, %55, %cst_17 {dimension_numbers = #tpu.dot_dimension_numbers<[1], [0], [0], [1], [0, 0, 1, 1], [], []>} : vector<16x8xf32>, vector<8x32xf32>, vector<16x32xf32> -> vector<16x32xf32>
    %57 = arith.addf %34, %56 : vector<16x32xf32>
    %58 = vector.extract_strided_slice %12 {offsets = [0, 16], sizes = [16, 8], strides = [1, 1]} : vector<16x96xf32> to vector<16x8xf32>
    %59 = vector.shape_cast %58 : vector<16x8xf32> to vector<2x8x8xf32>
    %60 = vector.extract_strided_slice %12 {offsets = [0, 48], sizes = [16, 8], strides = [1, 1]} : vector<16x96xf32> to vector<16x8xf32>
    %61 = vector.shape_cast %60 : vector<16x8xf32> to vector<2x8x8xf32>
    %62 = vector.extract_strided_slice %12 {offsets = [0, 80], sizes = [16, 8], strides = [1, 1]} : vector<16x96xf32> to vector<16x8xf32>
    %63 = vector.shape_cast %62 : vector<16x8xf32> to vector<2x8x8xf32>
    "tpu.trace_start"() <{level = 10 : i32, message = "bse,bte->bst"}> : () -> ()
    %cst_18 = arith.constant dense<0.000000e+00> : vector<2x8x8xf32>
    %64 = tpu.matmul %59, %61, %cst_18 {dimension_numbers = #tpu.dot_dimension_numbers<[2], [2], [1], [1], [0, 0, 0, 1, 1, 1], [0], [0]>} : vector<2x8x8xf32>, vector<2x8x8xf32>, vector<2x8x8xf32> -> vector<2x8x8xf32>
    "tpu.trace_stop"() : () -> ()
    %cst_19 = arith.constant 0.353553385 : f32
    %65 = vector.broadcast %cst_19 : f32 to vector<2x8x8xf32>
    %66 = arith.mulf %64, %65 : vector<2x8x8xf32>
    %cst_20 = arith.constant dense<0xFF800000> : vector<2x8xf32>
    %67 = vector.multi_reduction <maximumf>, %66, %cst_20 [2] : vector<2x8x8xf32> to vector<2x8xf32>
    %68 = vector.shape_cast %67 : vector<2x8xf32> to vector<2x8x1xf32>
    %69 = vector.broadcast %68 : vector<2x8x1xf32> to vector<2x8x8xf32>
    %70 = arith.subf %66, %69 : vector<2x8x8xf32>
    %71 = math.exp %70 : vector<2x8x8xf32>
    %cst_21 = arith.constant dense<0.000000e+00> : vector<2x8xf32>
    %72 = vector.multi_reduction <add>, %71, %cst_21 [2] : vector<2x8x8xf32> to vector<2x8xf32>
    %73 = vector.shape_cast %72 : vector<2x8xf32> to vector<2x8x1xf32>
    %74 = vector.broadcast %73 : vector<2x8x1xf32> to vector<2x8x8xf32>
    %75 = arith.divf %71, %74 : vector<2x8x8xf32>
    "tpu.trace_start"() <{level = 10 : i32, message = "bst,bte->bse"}> : () -> ()
    %cst_22 = arith.constant dense<0.000000e+00> : vector<2x8x8xf32>
    %76 = tpu.matmul %75, %63, %cst_22 {dimension_numbers = #tpu.dot_dimension_numbers<[2], [1], [1], [2], [0, 0, 0, 1, 1, 2], [0], [0]>} : vector<2x8x8xf32>, vector<2x8x8xf32>, vector<2x8x8xf32> -> vector<2x8x8xf32>
    "tpu.trace_stop"() : () -> ()
    %77 = vector.shape_cast %76 : vector<2x8x8xf32> to vector<16x8xf32>
    %78 = vector.extract_strided_slice %4 {offsets = [16, 0], sizes = [8, 32], strides = [1, 1]} : vector<32x32xf32> to vector<8x32xf32>
    %cst_23 = arith.constant dense<0.000000e+00> : vector<16x32xf32>
    %79 = tpu.matmul %77, %78, %cst_23 {dimension_numbers = #tpu.dot_dimension_numbers<[1], [0], [0], [1], [0, 0, 1, 1], [], []>} : vector<16x8xf32>, vector<8x32xf32>, vector<16x32xf32> -> vector<16x32xf32>
    %80 = arith.addf %57, %79 : vector<16x32xf32>
    %81 = vector.extract_strided_slice %12 {offsets = [0, 24], sizes = [16, 8], strides = [1, 1]} : vector<16x96xf32> to vector<16x8xf32>
    %82 = vector.shape_cast %81 : vector<16x8xf32> to vector<2x8x8xf32>
    %83 = vector.extract_strided_slice %12 {offsets = [0, 56], sizes = [16, 8], strides = [1, 1]} : vector<16x96xf32> to vector<16x8xf32>
    %84 = vector.shape_cast %83 : vector<16x8xf32> to vector<2x8x8xf32>
    %85 = vector.extract_strided_slice %12 {offsets = [0, 88], sizes = [16, 8], strides = [1, 1]} : vector<16x96xf32> to vector<16x8xf32>
    %86 = vector.shape_cast %85 : vector<16x8xf32> to vector<2x8x8xf32>
    "tpu.trace_start"() <{level = 10 : i32, message = "bse,bte->bst"}> : () -> ()
    %cst_24 = arith.constant dense<0.000000e+00> : vector<2x8x8xf32>
    %87 = tpu.matmul %82, %84, %cst_24 {dimension_numbers = #tpu.dot_dimension_numbers<[2], [2], [1], [1], [0, 0, 0, 1, 1, 1], [0], [0]>} : vector<2x8x8xf32>, vector<2x8x8xf32>, vector<2x8x8xf32> -> vector<2x8x8xf32>
    "tpu.trace_stop"() : () -> ()
    %cst_25 = arith.constant 0.353553385 : f32
    %88 = vector.broadcast %cst_25 : f32 to vector<2x8x8xf32>
    %89 = arith.mulf %87, %88 : vector<2x8x8xf32>
    %cst_26 = arith.constant dense<0xFF800000> : vector<2x8xf32>
    %90 = vector.multi_reduction <maximumf>, %89, %cst_26 [2] : vector<2x8x8xf32> to vector<2x8xf32>
    %91 = vector.shape_cast %90 : vector<2x8xf32> to vector<2x8x1xf32>
    %92 = vector.broadcast %91 : vector<2x8x1xf32> to vector<2x8x8xf32>
    %93 = arith.subf %89, %92 : vector<2x8x8xf32>
    %94 = math.exp %93 : vector<2x8x8xf32>
    %cst_27 = arith.constant dense<0.000000e+00> : vector<2x8xf32>
    %95 = vector.multi_reduction <add>, %94, %cst_27 [2] : vector<2x8x8xf32> to vector<2x8xf32>
    %96 = vector.shape_cast %95 : vector<2x8xf32> to vector<2x8x1xf32>
    %97 = vector.broadcast %96 : vector<2x8x1xf32> to vector<2x8x8xf32>
    %98 = arith.divf %94, %97 : vector<2x8x8xf32>
    "tpu.trace_start"() <{level = 10 : i32, message = "bst,bte->bse"}> : () -> ()
    %cst_28 = arith.constant dense<0.000000e+00> : vector<2x8x8xf32>
    %99 = tpu.matmul %98, %86, %cst_28 {dimension_numbers = #tpu.dot_dimension_numbers<[2], [1], [1], [2], [0, 0, 0, 1, 1, 2], [0], [0]>} : vector<2x8x8xf32>, vector<2x8x8xf32>, vector<2x8x8xf32> -> vector<2x8x8xf32>
    "tpu.trace_stop"() : () -> ()
    %100 = vector.shape_cast %99 : vector<2x8x8xf32> to vector<16x8xf32>
    %101 = vector.extract_strided_slice %4 {offsets = [24, 0], sizes = [8, 32], strides = [1, 1]} : vector<32x32xf32> to vector<8x32xf32>
    %cst_29 = arith.constant dense<0.000000e+00> : vector<16x32xf32>
    %102 = tpu.matmul %100, %101, %cst_29 {dimension_numbers = #tpu.dot_dimension_numbers<[1], [0], [0], [1], [0, 0, 1, 1], [], []>} : vector<16x8xf32>, vector<8x32xf32>, vector<16x32xf32> -> vector<16x32xf32>
    %103 = arith.addf %80, %102 : vector<16x32xf32>
    %104 = vector.broadcast %6 : vector<1x32xf32> to vector<16x32xf32>
    %105 = arith.addf %103, %104 : vector<16x32xf32>
    %106 = arith.addf %9, %105 : vector<16x32xf32>
    %cst_30 = arith.constant dense<0.000000e+00> : vector<16xf32>
    %107 = vector.multi_reduction <add>, %106, %cst_30 [1] : vector<16x32xf32> to vector<16xf32>
    %108 = vector.shape_cast %107 : vector<16xf32> to vector<16x1xf32>
    %cst_31 = arith.constant 3.200000e+01 : f32
    %109 = vector.broadcast %cst_31 : f32 to vector<16x1xf32>
    %110 = arith.divf %108, %109 : vector<16x1xf32>
    %111 = vector.broadcast %110 : vector<16x1xf32> to vector<16x32xf32>
    %112 = arith.subf %106, %111 : vector<16x32xf32>
    %113 = vector.broadcast %110 : vector<16x1xf32> to vector<16x32xf32>
    %114 = arith.subf %106, %113 : vector<16x32xf32>
    %115 = arith.mulf %112, %114 : vector<16x32xf32>
    %cst_32 = arith.constant dense<0.000000e+00> : vector<16xf32>
    %116 = vector.multi_reduction <add>, %115, %cst_32 [1] : vector<16x32xf32> to vector<16xf32>
    %117 = vector.shape_cast %116 : vector<16xf32> to vector<16x1xf32>
    %cst_33 = arith.constant 3.200000e+01 : f32
    %118 = vector.broadcast %cst_33 : f32 to vector<16x1xf32>
    %119 = arith.divf %117, %118 : vector<16x1xf32>
    %120 = vector.broadcast %110 : vector<16x1xf32> to vector<16x32xf32>
    %121 = arith.subf %106, %120 : vector<16x32xf32>
    %cst_34 = arith.constant 9.99999974E-6 : f32
    %122 = vector.broadcast %cst_34 : f32 to vector<16x1xf32>
    %123 = arith.addf %119, %122 : vector<16x1xf32>
    %124 = math.rsqrt %123 : vector<16x1xf32>
    %125 = vector.broadcast %124 : vector<16x1xf32> to vector<16x32xf32>
    %126 = arith.mulf %121, %125 : vector<16x32xf32>
    %127 = vector.broadcast %7 : vector<1x32xf32> to vector<16x32xf32>
    %128 = arith.mulf %126, %127 : vector<16x32xf32>
    %129 = vector.broadcast %8 : vector<1x32xf32> to vector<16x32xf32>
    %130 = arith.addf %128, %129 : vector<16x32xf32>
    %131 = vector.shape_cast %130 : vector<16x32xf32> to vector<2x8x32xf32>
    %c0_35 = arith.constant 0 : index
    %c0_36 = arith.constant 0 : index
    %c0_37 = arith.constant 0 : index
    %132 = vector.load %arg4[%c0_35, %c0_36, %c0_37] : memref<2x8x32xf32, #tpu.memory_space<vmem>>, vector<2x8x32xf32>
    tpu.vector_store %arg4[%c0_35, %c0_36, %c0_37], %131 {strides = array<i32>} : memref<2x8x32xf32, #tpu.memory_space<vmem>>, vector<2x8x32xf32>,
    return
  }
  func.func @transform_0(%arg0: i32) -> (i32, i32, i32) {
    %c0_i32 = arith.constant 0 : i32
    %c0_i32_0 = arith.constant 0 : i32
    %c0_i32_1 = arith.constant 0 : i32
    %c0_i32_2 = arith.constant 0 : i32
    return %c0_i32, %c0_i32_0, %c0_i32_1 : i32, i32, i32
  }
  func.func @transform_1(%arg0: i32) -> (i32, i32) {
    %c0_i32 = arith.constant 0 : i32
    %c0_i32_0 = arith.constant 0 : i32
    %c0_i32_1 = arith.constant 0 : i32
    return %c0_i32, %c0_i32_0 : i32, i32
  }
  func.func @transform_2(%arg0: i32) -> (i32, i32) {
    %c0_i32 = arith.constant 0 : i32
    %c0_i32_0 = arith.constant 0 : i32
    %c0_i32_1 = arith.constant 0 : i32
    return %c0_i32, %c0_i32_0 : i32, i32
  }
  func.func @transform_3(%arg0: i32) -> (i32, i32, i32) {
    %c0_i32 = arith.constant 0 : i32
    %c0_i32_0 = arith.constant 0 : i32
    %c0_i32_1 = arith.constant 0 : i32
    %c0_i32_2 = arith.constant 0 : i32
    return %c0_i32, %c0_i32_0, %c0_i32_1 : i32, i32, i32
  }
}

</mosaic_0001>

<llo_original>
// kernel: cross_head_attention.1
$region0: #{cross_head_attention.1}
  #allocation0 [shape = 'u32[]', space=smem, size = 0x4, offset = 0x4, fixed_abs, tag = 'smem constant byte address 0x4 - core index']
  #allocation1 [shape = 'u32[144,128]{1,0:T(1,128)}', space=vmem, size = 0x12000, scoped, tag = 'internal scratch']
  %s0 = inlined_call_operand.vmem [shape: f32[2,8,32], index: 0, kind: input, shape index: {}]
  %s1 = inlined_call_operand.vmem [shape: f32[32,128], index: 1, kind: input, shape index: {}]
  %s2 = inlined_call_operand.vmem [shape: f32[2,96], index: 2, kind: input, shape index: {}]
  %s3 = inlined_call_operand.vmem [shape: f32[2,8,32], index: 3, kind: output, shape index: {}]
  %s4 = sld [smem:[#allocation0]]
  $region22: #{cross_head_attention.1} parent=0
    _
  %s6 = ssub.s32 1, %s4
  %s7 = scalar_select 0, %s6, %s4
  // Predicated region
  $region2: #{cross_head_attention.1} parent=0 // pred_check
    _
  $region3: #{cross_head_attention.1} parent=0 // pred_check_branch
    %9 = sbr.rel (0) target = $region5
  $region4: #{cross_head_attention.1} parent=0 // pred_region
    _
  $region5: #{cross_head_attention.1} parent=0 // pred_fallthru
    _
  // Predicated region
  $region6: #{cross_head_attention.1} parent=0 // pred_check
    _
  $region7: #{cross_head_attention.1} parent=0 // pred_check_branch
    %11 = sbr.rel (0) target = $region9
  $region8: #{cross_head_attention.1} parent=0 // pred_region
    _
  $region9: #{cross_head_attention.1} parent=0 // pred_fallthru
    _
  // Predicated region
  $region10: #{cross_head_attention.1} parent=0 // pred_check
    _
  $region11: #{cross_head_attention.1} parent=0 // pred_check_branch
    %13 = sbr.rel (0) target = $region13
  $region12: #{cross_head_attention.1} parent=0 // pred_region
    _
  $region13: #{cross_head_attention.1} parent=0 // pred_fallthru
    _
  %v14 = vld [vmem:[%s0] sm:$0xff]
  %v15 = vld [vmem:[%s0 + $0x8] sm:$0xff]
  %v16 = vld [vmem:[%s1] sm:$0xff]
  %v17 = vld [vmem:[%s1 + $0x8] sm:$0xff]
  %v18 = vld [vmem:[%s1 + $0x10] sm:$0xff]
  %v19 = vld [vmem:[%s1 + $0x18] sm:$0xff]
  %v20 = vld [vmem:[%s2] sm:$0x3]
  %v21 = vlaneseq
  %v22 = vshrl.u32 %v21, 7
  %v23 = vsub.s32 0, %v22
  %v24 = vrot.slane %v20, %v23
  %vm25 = vcmask 261120
  %v27 = vsel %vm25, %v14, 0
  %v30 = vsel %vm25, %v15, 0
  %32 = vmatprep.subr.mxu0 0.0
  %33 = vmatpush1.msra.mxu0 %v16
  %34 = vmatprep.subr.mxu0 0.0
  %35 = vmatpush1.msra.mxu0 %v17
  %36 = vmatprep.subr.mxu0 0.0
  %37 = vmatpush1.msra.mxu0 %v18
  %38 = vmatprep.subr.mxu0 0.0
  %39 = vmatpush1.msra.mxu0 %v19
  %40 = vmatprep.subr.mxu0 0.0
  %41 = vmatpush1.msra.mxu0 0.0
  %42 = vmatprep.subr.mxu0 0.0
  %43 = vmatpush1.msra.mxu0 0.0
  %44 = vmatprep.subr.mxu0 0.0
  %45 = vmatpush1.msra.mxu0 0.0
  %46 = vmatprep.subr.mxu0 0.0
  %47 = vmatpush1.msra.mxu0 0.0
  %48 = vmatprep.subr.mxu0 0.0
  %49 = vmatpush1.msra.mxu0 0.0
  %50 = vmatprep.subr.mxu0 0.0
  %51 = vmatpush1.msra.mxu0 0.0
  %52 = vmatprep.subr.mxu0 0.0
  %53 = vmatpush1.msra.mxu0 0.0
  %54 = vmatprep.subr.mxu0 0.0
  %55 = vmatpush1.msra.mxu0 0.0
  %56 = vmatprep.subr.mxu0 0.0
  %57 = vmatpush1.msra.mxu0 0.0
  %58 = vmatprep.subr.mxu0 0.0
  %59 = vmatpush1.msra.mxu0 0.0
  %60 = vmatprep.subr.mxu0 0.0
  %61 = vmatpush1.msra.mxu0 0.0
  %62 = vmatprep.subr.mxu0 0.0
  %63 = vmatpush1.msra.mxu0 0.0
  %64 = vmatprep.subr.mxu0 0.0
  %65 = vmatpush1.msra.mxu0 0.0
  %66 = vmatprep.subr.mxu0 0.0
  %67 = vmatpush1.msra.mxu0 0.0
  %68 = vmatprep.subr.mxu0 0.0
  %69 = vmatpush1.msra.mxu0 0.0
  %70 = vmatprep.subr.mxu0 0.0
  %71 = vmatpush1.msra.mxu0 0.0
  %72 = vmatprep.subr.mxu0 0.0
  %73 = vmatpush1.msra.mxu0 0.0
  %74 = vmatprep.subr.mxu0 0.0
  %75 = vmatpush1.msra.mxu0 0.0
  %76 = vmatprep.subr.mxu0 0.0
  %77 = vmatpush1.msra.mxu0 0.0
  %78 = vmatprep.subr.mxu0 0.0
  %79 = vmatpush1.msra.mxu0 0.0
  %80 = vmatprep.subr.mxu0 0.0
  %81 = vmatpush1.msra.mxu0 0.0
  %82 = vmatprep.subr.mxu0 0.0
  %83 = vmatpush1.msra.mxu0 0.0
  %84 = vmatprep.subr.mxu0 0.0
  %85 = vmatpush1.msra.mxu0 0.0
  %86 = vmatprep.subr.mxu0 0.0
  %87 = vmatpush1.msra.mxu0 0.0
  %88 = vmatprep.subr.mxu0 0.0
  %89 = vmatpush1.msra.mxu0 0.0
  %90 = vmatprep.subr.mxu0 0.0
  %91 = vmatpush1.msra.mxu0 0.0
  %92 = vmatprep.subr.mxu0 0.0
  %93 = vmatpush1.msra.mxu0 0.0
  %94 = vmatprep.subr.mxu0 0.0
  %95 = vmatpush1.msra.mxu0 0.0
  %96 = vmatprep.mubr.f32.mxu0 0.0
  %97 = vmatmul.mubr.f32.gmra.mrb[0].mxu0 %v27
  %v98 = vpop.f32.mrb[0].mxu0
  %v99 = vadd.f32 %v24, %v98
  %v100 = vpop.f32.mrb[0].mxu0
  %101 = vmatprep.mubr.f32.mxu0 0.0
  %102 = vmatmul.mubr.f32.gmra.mrb[0].mxu0 %v30
  %v103 = vpop.f32.mrb[0].mxu0
  %v104 = vadd.f32 %v24, %v103
  %v105 = vpop.f32.mrb[0].mxu0
  %106 = vdwg.mxu0
  %108 = vrot.lane.b32.xlu0 %v99, 96
  %v109 = vpop.permute.xlu0 %108
  %vm110 = vcmask 64512
  %v111 = vsel %vm110, %v99, 0
  %v113 = vsel %vm110, %v109, 0
  %115 = vmatprep.subr.mxu0 0.0
  %116 = vmatpush1.xpose.msra.mxu0 %v113
  %117 = vmatprep.subr.mxu0 0.0
  %118 = vmatpush1.xpose.msra.mxu0 0.0
  %119 = vmatprep.subr.mxu0 0.0
  %120 = vmatpush1.xpose.msra.mxu0 0.0
  %121 = vmatprep.subr.mxu0 0.0
  %122 = vmatpush1.xpose.msra.mxu0 0.0
  %123 = vmatprep.subr.mxu0 0.0
  %124 = vmatpush1.xpose.msra.mxu0 0.0
  %125 = vmatprep.subr.mxu0 0.0
  %126 = vmatpush1.xpose.msra.mxu0 0.0
  %127 = vmatprep.subr.mxu0 0.0
  %128 = vmatpush1.xpose.msra.mxu0 0.0
  %129 = vmatprep.subr.mxu0 0.0
  %130 = vmatpush1.xpose.msra.mxu0 0.0
  %131 = vmatprep.subr.mxu0 0.0
  %132 = vmatpush1.xpose.msra.mxu0 0.0
  %133 = vmatprep.subr.mxu0 0.0
  %134 = vmatpush1.xpose.msra.mxu0 0.0
  %135 = vmatprep.subr.mxu0 0.0
  %136 = vmatpush1.xpose.msra.mxu0 0.0
  %137 = vmatprep.subr.mxu0 0.0
  %138 = vmatpush1.xpose.msra.mxu0 0.0
  %139 = vmatprep.subr.mxu0 0.0
  %140 = vmatpush1.xpose.msra.mxu0 0.0
  %141 = vmatprep.subr.mxu0 0.0
  %142 = vmatpush1.xpose.msra.mxu0 0.0
  %143 = vmatprep.subr.mxu0 0.0
  %144 = vmatpush1.xpose.msra.mxu0 0.0
  %145 = vmatprep.subr.mxu0 0.0
  %146 = vmatpush1.xpose.msra.mxu0 0.0
  %147 = vmatprep.subr.mxu0 0.0
  %148 = vmatpush1.xpose.msra.mxu0 0.0
  %149 = vmatprep.subr.mxu0 0.0
  %150 = vmatpush1.xpose.msra.mxu0 0.0
  %151 = vmatprep.subr.mxu0 0.0
  %152 = vmatpush1.xpose.msra.mxu0 0.0
  %153 = vmatprep.subr.mxu0 0.0
  %154 = vmatpush1.xpose.msra.mxu0 0.0
  %155 = vmatprep.subr.mxu0 0.0
  %156 = vmatpush1.xpose.msra.mxu0 0.0
  %157 = vmatprep.subr.mxu0 0.0
  %158 = vmatpush1.xpose.msra.mxu0 0.0
  %159 = vmatprep.subr.mxu0 0.0
  %160 = vmatpush1.xpose.msra.mxu0 0.0
  %161 = vmatprep.subr.mxu0 0.0
  %162 = vmatpush1.xpose.msra.mxu0 0.0
  %163 = vmatprep.subr.mxu0 0.0
  %164 = vmatpush1.xpose.msra.mxu0 0.0
  %165 = vmatprep.subr.mxu0 0.0
  %166 = vmatpush1.xpose.msra.mxu0 0.0
  %167 = vmatprep.subr.mxu0 0.0
  %168 = vmatpush1.xpose.msra.mxu0 0.0
  %169 = vmatprep.subr.mxu0 0.0
  %170 = vmatpush1.xpose.msra.mxu0 0.0
  %171 = vmatprep.subr.mxu0 0.0
  %172 = vmatpush1.xpose.msra.mxu0 0.0
  %173 = vmatprep.subr.mxu0 0.0
  %174 = vmatpush1.xpose.msra.mxu0 0.0
  %175 = vmatprep.subr.mxu0 0.0
  %176 = vmatpush1.xpose.msra.mxu0 0.0
  %177 = vmatprep.subr.mxu0 0.0
  %178 = vmatpush1.xpose.msra.mxu0 0.0
  %179 = vmatprep.mubr.f32.mxu0 0.0
  %180 = vmatmul.mubr.f32.gmra.mrb[0].mxu0 %v111
  %v181 = vpop.f32.mrb[0].mxu0
  %v182 = vadd.f32 0.0, %v181
  %v183 = vpop.f32.mrb[0].mxu0
  %184 = vdwg.mxu0
  %186 = vrot.lane.b32.xlu0 %v104, 96
  %v187 = vpop.permute.xlu0 %186
  %v188 = vsel %vm110, %v104, 0
  %v190 = vsel %vm110, %v187, 0
  %192 = vmatprep.subr.mxu0 0.0
  %193 = vmatpush1.xpose.msra.mxu0 %v190
  %194 = vmatprep.subr.mxu0 0.0
  %195 = vmatpush1.xpose.msra.mxu0 0.0
  %196 = vmatprep.subr.mxu0 0.0
  %197 = vmatpush1.xpose.msra.mxu0 0.0
  %198 = vmatprep.subr.mxu0 0.0
  %199 = vmatpush1.xpose.msra.mxu0 0.0
  %200 = vmatprep.subr.mxu0 0.0
  %201 = vmatpush1.xpose.msra.mxu0 0.0
  %202 = vmatprep.subr.mxu0 0.0
  %203 = vmatpush1.xpose.msra.mxu0 0.0
  %204 = vmatprep.subr.mxu0 0.0
  %205 = vmatpush1.xpose.msra.mxu0 0.0
  %206 = vmatprep.subr.mxu0 0.0
  %207 = vmatpush1.xpose.msra.mxu0 0.0
  %208 = vmatprep.subr.mxu0 0.0
  %209 = vmatpush1.xpose.msra.mxu0 0.0
  %210 = vmatprep.subr.mxu0 0.0
  %211 = vmatpush1.xpose.msra.mxu0 0.0
  %212 = vmatprep.subr.mxu0 0.0
  %213 = vmatpush1.xpose.msra.mxu0 0.0
  %214 = vmatprep.subr.mxu0 0.0
  %215 = vmatpush1.xpose.msra.mxu0 0.0
  %216 = vmatprep.subr.mxu0 0.0
  %217 = vmatpush1.xpose.msra.mxu0 0.0
  %218 = vmatprep.subr.mxu0 0.0
  %219 = vmatpush1.xpose.msra.mxu0 0.0
  %220 = vmatprep.subr.mxu0 0.0
  %221 = vmatpush1.xpose.msra.mxu0 0.0
  %222 = vmatprep.subr.mxu0 0.0
  %223 = vmatpush1.xpose.msra.mxu0 0.0
  %224 = vmatprep.subr.mxu0 0.0
  %225 = vmatpush1.xpose.msra.mxu0 0.0
  %226 = vmatprep.subr.mxu0 0.0
  %227 = vmatpush1.xpose.msra.mxu0 0.0
  %228 = vmatprep.subr.mxu0 0.0
  %229 = vmatpush1.xpose.msra.mxu0 0.0
  %230 = vmatprep.subr.mxu0 0.0
  %231 = vmatpush1.xpose.msra.mxu0 0.0
  %232 = vmatprep.subr.mxu0 0.0
  %233 = vmatpush1.xpose.msra.mxu0 0.0
  %234 = vmatprep.subr.mxu0 0.0
  %235 = vmatpush1.xpose.msra.mxu0 0.0
  %236 = vmatprep.subr.mxu0 0.0
  %237 = vmatpush1.xpose.msra.mxu0 0.0
  %238 = vmatprep.subr.mxu0 0.0
  %239 = vmatpush1.xpose.msra.mxu0 0.0
  %240 = vmatprep.subr.mxu0 0.0
  %241 = vmatpush1.xpose.msra.mxu0 0.0
  %242 = vmatprep.subr.mxu0 0.0
  %243 = vmatpush1.xpose.msra.mxu0 0.0
  %244 = vmatprep.subr.mxu0 0.0
  %245 = vmatpush1.xpose.msra.mxu0 0.0
  %246 = vmatprep.subr.mxu0 0.0
  %247 = vmatpush1.xpose.msra.mxu0 0.0
  %248 = vmatprep.subr.mxu0 0.0
  %249 = vmatpush1.xpose.msra.mxu0 0.0
  %250 = vmatprep.subr.mxu0 0.0
  %251 = vmatpush1.xpose.msra.mxu0 0.0
  %252 = vmatprep.subr.mxu0 0.0
  %253 = vmatpush1.xpose.msra.mxu0 0.0
  %254 = vmatprep.subr.mxu0 0.0
  %255 = vmatpush1.xpose.msra.mxu0 0.0
  %256 = vmatprep.mubr.f32.mxu0 0.0
  %257 = vmatmul.mubr.f32.gmra.mrb[0].mxu0 %v188
  %v258 = vpop.f32.mrb[0].mxu0
  %v259 = vadd.f32 0.0, %v258
  %v260 = vpop.f32.mrb[0].mxu0
  %261 = vdwg.mxu0
  %v262 = vmul.f32 %v182, 0.35355338
  %v263 = vmul.f32 %v259, 0.35355338
  %v264 = vsel %vm110, %v262, -inf
  %265 = vmax.xlane.f32.xlu0 %v264
  %v266 = vpop.xlane.xlu0 %265
  %v267 = vsel %vm110, %v263, -inf
  %268 = vmax.xlane.f32.xlu0 %v267
  %v269 = vpop.xlane.xlu0 %268
  %v270 = vsub.f32 %v262, %v266
  %v271 = vsub.f32 %v263, %v269
  %v272 = vmul.f32 %v270, 1.442695
  %v273 = vpow.pop %v272
  %v274 = vmul.f32 %v271, 1.442695
  %v275 = vpow.pop %v274
  %v276 = vsel %vm110, %v273, 0.0
  %277 = vadd.xlane.f32.xlu0 %v276
  %v278 = vpop.xlane.xlu0 %277
  %v279 = vsel %vm110, %v275, 0.0
  %280 = vadd.xlane.f32.xlu0 %v279
  %v281 = vpop.xlane.xlu0 %280
  %v282 = vrcp.pop %v278
  %v283 = vmul.f32 %v273, %v282
  %v284 = vrcp.pop %v281
  %v285 = vmul.f32 %v275, %v284
  %286 = vrot.lane.b32.xlu0 %v99, 64
  %v287 = vpop.permute.xlu0 %286
  %v290 = vsel %vm110, %v283, 0
  %292 = vmatprep.subr.mxu0 0.0
  %293 = vmatpush1.msra.mxu0 %v287
  %294 = vmatprep.subr.mxu0 0.0
  %295 = vmatpush1.msra.mxu0 0.0
  %296 = vmatprep.subr.mxu0 0.0
  %297 = vmatpush1.msra.mxu0 0.0
  %298 = vmatprep.subr.mxu0 0.0
  %299 = vmatpush1.msra.mxu0 0.0
  %300 = vmatprep.subr.mxu0 0.0
  %301 = vmatpush1.msra.mxu0 0.0
  %302 = vmatprep.subr.mxu0 0.0
  %303 = vmatpush1.msra.mxu0 0.0
  %304 = vmatprep.subr.mxu0 0.0
  %305 = vmatpush1.msra.mxu0 0.0
  %306 = vmatprep.subr.mxu0 0.0
  %307 = vmatpush1.msra.mxu0 0.0
  %308 = vmatprep.subr.mxu0 0.0
  %309 = vmatpush1.msra.mxu0 0.0
  %310 = vmatprep.subr.mxu0 0.0
  %311 = vmatpush1.msra.mxu0 0.0
  %312 = vmatprep.subr.mxu0 0.0
  %313 = vmatpush1.msra.mxu0 0.0
  %314 = vmatprep.subr.mxu0 0.0
  %315 = vmatpush1.msra.mxu0 0.0
  %316 = vmatprep.subr.mxu0 0.0
  %317 = vmatpush1.msra.mxu0 0.0
  %318 = vmatprep.subr.mxu0 0.0
  %319 = vmatpush1.msra.mxu0 0.0
  %320 = vmatprep.subr.mxu0 0.0
  %321 = vmatpush1.msra.mxu0 0.0
  %322 = vmatprep.subr.mxu0 0.0
  %323 = vmatpush1.msra.mxu0 0.0
  %324 = vmatprep.subr.mxu0 0.0
  %325 = vmatpush1.msra.mxu0 0.0
  %326 = vmatprep.subr.mxu0 0.0
  %327 = vmatpush1.msra.mxu0 0.0
  %328 = vmatprep.subr.mxu0 0.0
  %329 = vmatpush1.msra.mxu0 0.0
  %330 = vmatprep.subr.mxu0 0.0
  %331 = vmatpush1.msra.mxu0 0.0
  %332 = vmatprep.subr.mxu0 0.0
  %333 = vmatpush1.msra.mxu0 0.0
  %334 = vmatprep.subr.mxu0 0.0
  %335 = vmatpush1.msra.mxu0 0.0
  %336 = vmatprep.subr.mxu0 0.0
  %337 = vmatpush1.msra.mxu0 0.0
  %338 = vmatprep.subr.mxu0 0.0
  %339 = vmatpush1.msra.mxu0 0.0
  %340 = vmatprep.subr.mxu0 0.0
  %341 = vmatpush1.msra.mxu0 0.0
  %342 = vmatprep.subr.mxu0 0.0
  %343 = vmatpush1.msra.mxu0 0.0
  %344 = vmatprep.subr.mxu0 0.0
  %345 = vmatpush1.msra.mxu0 0.0
  %346 = vmatprep.subr.mxu0 0.0
  %347 = vmatpush1.msra.mxu0 0.0
  %348 = vmatprep.subr.mxu0 0.0
  %349 = vmatpush1.msra.mxu0 0.0
  %350 = vmatprep.subr.mxu0 0.0
  %351 = vmatpush1.msra.mxu0 0.0
  %352 = vmatprep.subr.mxu0 0.0
  %353 = vmatpush1.msra.mxu0 0.0
  %354 = vmatprep.subr.mxu0 0.0
  %355 = vmatpush1.msra.mxu0 0.0
  %356 = vmatprep.mubr.f32.mxu0 0.0
  %357 = vmatmul.mubr.f32.gmra.mrb[0].mxu0 %v290
  %v358 = vpop.f32.mrb[0].mxu0
  %v359 = vadd.f32 0.0, %v358
  %v360 = vpop.f32.mrb[0].mxu0
  %361 = vdwg.mxu0
  %362 = vrot.lane.b32.xlu0 %v104, 64
  %v363 = vpop.permute.xlu0 %362
  %v366 = vsel %vm110, %v285, 0
  %368 = vmatprep.subr.mxu0 0.0
  %369 = vmatpush1.msra.mxu0 %v363
  %370 = vmatprep.subr.mxu0 0.0
  %371 = vmatpush1.msra.mxu0 0.0
  %372 = vmatprep.subr.mxu0 0.0
  %373 = vmatpush1.msra.mxu0 0.0
  %374 = vmatprep.subr.mxu0 0.0
  %375 = vmatpush1.msra.mxu0 0.0
  %376 = vmatprep.subr.mxu0 0.0
  %377 = vmatpush1.msra.mxu0 0.0
  %378 = vmatprep.subr.mxu0 0.0
  %379 = vmatpush1.msra.mxu0 0.0
  %380 = vmatprep.subr.mxu0 0.0
  %381 = vmatpush1.msra.mxu0 0.0
  %382 = vmatprep.subr.mxu0 0.0
  %383 = vmatpush1.msra.mxu0 0.0
  %384 = vmatprep.subr.mxu0 0.0
  %385 = vmatpush1.msra.mxu0 0.0
  %386 = vmatprep.subr.mxu0 0.0
  %387 = vmatpush1.msra.mxu0 0.0
  %388 = vmatprep.subr.mxu0 0.0
  %389 = vmatpush1.msra.mxu0 0.0
  %390 = vmatprep.subr.mxu0 0.0
  %391 = vmatpush1.msra.mxu0 0.0
  %392 = vmatprep.subr.mxu0 0.0
  %393 = vmatpush1.msra.mxu0 0.0
  %394 = vmatprep.subr.mxu0 0.0
  %395 = vmatpush1.msra.mxu0 0.0
  %396 = vmatprep.subr.mxu0 0.0
  %397 = vmatpush1.msra.mxu0 0.0
  %398 = vmatprep.subr.mxu0 0.0
  %399 = vmatpush1.msra.mxu0 0.0
  %400 = vmatprep.subr.mxu0 0.0
  %401 = vmatpush1.msra.mxu0 0.0
  %402 = vmatprep.subr.mxu0 0.0
  %403 = vmatpush1.msra.mxu0 0.0
  %404 = vmatprep.subr.mxu0 0.0
  %405 = vmatpush1.msra.mxu0 0.0
  %406 = vmatprep.subr.mxu0 0.0
  %407 = vmatpush1.msra.mxu0 0.0
  %408 = vmatprep.subr.mxu0 0.0
  %409 = vmatpush1.msra.mxu0 0.0
  %410 = vmatprep.subr.mxu0 0.0
  %411 = vmatpush1.msra.mxu0 0.0
  %412 = vmatprep.subr.mxu0 0.0
  %413 = vmatpush1.msra.mxu0 0.0
  %414 = vmatprep.subr.mxu0 0.0
  %415 = vmatpush1.msra.mxu0 0.0
  %416 = vmatprep.subr.mxu0 0.0
  %417 = vmatpush1.msra.mxu0 0.0
  %418 = vmatprep.subr.mxu0 0.0
  %419 = vmatpush1.msra.mxu0 0.0
  %420 = vmatprep.subr.mxu0 0.0
  %421 = vmatpush1.msra.mxu0 0.0
  %422 = vmatprep.subr.mxu0 0.0
  %423 = vmatpush1.msra.mxu0 0.0
  %424 = vmatprep.subr.mxu0 0.0
  %425 = vmatpush1.msra.mxu0 0.0
  %426 = vmatprep.subr.mxu0 0.0
  %427 = vmatpush1.msra.mxu0 0.0
  %428 = vmatprep.subr.mxu0 0.0
  %429 = vmatpush1.msra.mxu0 0.0
  %430 = vmatprep.subr.mxu0 0.0
  %431 = vmatpush1.msra.mxu0 0.0
  %432 = vmatprep.mubr.f32.mxu0 0.0
  %433 = vmatmul.mubr.f32.gmra.mrb[0].mxu0 %v366
  %v434 = vpop.f32.mrb[0].mxu0
  %v435 = vadd.f32 0.0, %v434
  %v436 = vpop.f32.mrb[0].mxu0
  %437 = vdwg.mxu0
  %438 = vrot.lane.b32.xlu0 %v99, 120
  %v439 = vpop.permute.xlu0 %438
  %440 = vrot.lane.b32.xlu0 %v99, 88
  %v441 = vpop.permute.xlu0 %440
  %v442 = vsel %vm110, %v439, 0
  %v444 = vsel %vm110, %v441, 0
  %446 = vmatprep.subr.mxu0 0.0
  %447 = vmatpush1.xpose.msra.mxu0 %v444
  %448 = vmatprep.subr.mxu0 0.0
  %449 = vmatpush1.xpose.msra.mxu0 0.0
  %450 = vmatprep.subr.mxu0 0.0
  %451 = vmatpush1.xpose.msra.mxu0 0.0
  %452 = vmatprep.subr.mxu0 0.0
  %453 = vmatpush1.xpose.msra.mxu0 0.0
  %454 = vmatprep.subr.mxu0 0.0
  %455 = vmatpush1.xpose.msra.mxu0 0.0
  %456 = vmatprep.subr.mxu0 0.0
  %457 = vmatpush1.xpose.msra.mxu0 0.0
  %458 = vmatprep.subr.mxu0 0.0
  %459 = vmatpush1.xpose.msra.mxu0 0.0
  %460 = vmatprep.subr.mxu0 0.0
  %461 = vmatpush1.xpose.msra.mxu0 0.0
  %462 = vmatprep.subr.mxu0 0.0
  %463 = vmatpush1.xpose.msra.mxu0 0.0
  %464 = vmatprep.subr.mxu0 0.0
  %465 = vmatpush1.xpose.msra.mxu0 0.0
  %466 = vmatprep.subr.mxu0 0.0
  %467 = vmatpush1.xpose.msra.mxu0 0.0
  %468 = vmatprep.subr.mxu0 0.0
  %469 = vmatpush1.xpose.msra.mxu0 0.0
  %470 = vmatprep.subr.mxu0 0.0
  %471 = vmatpush1.xpose.msra.mxu0 0.0
  %472 = vmatprep.subr.mxu0 0.0
  %473 = vmatpush1.xpose.msra.mxu0 0.0
  %474 = vmatprep.subr.mxu0 0.0
  %475 = vmatpush1.xpose.msra.mxu0 0.0
  %476 = vmatprep.subr.mxu0 0.0
  %477 = vmatpush1.xpose.msra.mxu0 0.0
  %478 = vmatprep.subr.mxu0 0.0
  %479 = vmatpush1.xpose.msra.mxu0 0.0
  %480 = vmatprep.subr.mxu0 0.0
  %481 = vmatpush1.xpose.msra.mxu0 0.0
  %482 = vmatprep.subr.mxu0 0.0
  %483 = vmatpush1.xpose.msra.mxu0 0.0
  %484 = vmatprep.subr.mxu0 0.0
  %485 = vmatpush1.xpose.msra.mxu0 0.0
  %486 = vmatprep.subr.mxu0 0.0
  %487 = vmatpush1.xpose.msra.mxu0 0.0
  %488 = vmatprep.subr.mxu0 0.0
  %489 = vmatpush1.xpose.msra.mxu0 0.0
  %490 = vmatprep.subr.mxu0 0.0
  %491 = vmatpush1.xpose.msra.mxu0 0.0
  %492 = vmatprep.subr.mxu0 0.0
  %493 = vmatpush1.xpose.msra.mxu0 0.0
  %494 = vmatprep.subr.mxu0 0.0
  %495 = vmatpush1.xpose.msra.mxu0 0.0
  %496 = vmatprep.subr.mxu0 0.0
  %497 = vmatpush1.xpose.msra.mxu0 0.0
  %498 = vmatprep.subr.mxu0 0.0
  %499 = vmatpush1.xpose.msra.mxu0 0.0
  %500 = vmatprep.subr.mxu0 0.0
  %501 = vmatpush1.xpose.msra.mxu0 0.0
  %502 = vmatprep.subr.mxu0 0.0
  %503 = vmatpush1.xpose.msra.mxu0 0.0
  %504 = vmatprep.subr.mxu0 0.0
  %505 = vmatpush1.xpose.msra.mxu0 0.0
  %506 = vmatprep.subr.mxu0 0.0
  %507 = vmatpush1.xpose.msra.mxu0 0.0
  %508 = vmatprep.subr.mxu0 0.0
  %509 = vmatpush1.xpose.msra.mxu0 0.0
  %510 = vmatprep.mubr.f32.mxu0 0.0
  %511 = vmatmul.mubr.f32.gmra.mrb[0].mxu0 %v442
  %v512 = vpop.f32.mrb[0].mxu0
  %v513 = vadd.f32 0.0, %v512
  %v514 = vpop.f32.mrb[0].mxu0
  %515 = vdwg.mxu0
  %516 = vrot.lane.b32.xlu0 %v104, 120
  %v517 = vpop.permute.xlu0 %516
  %518 = vrot.lane.b32.xlu0 %v104, 88
  %v519 = vpop.permute.xlu0 %518
  %v520 = vsel %vm110, %v517, 0
  %v522 = vsel %vm110, %v519, 0
  %524 = vmatprep.subr.mxu0 0.0
  %525 = vmatpush1.xpose.msra.mxu0 %v522
  %526 = vmatprep.subr.mxu0 0.0
  %527 = vmatpush1.xpose.msra.mxu0 0.0
  %528 = vmatprep.subr.mxu0 0.0
  %529 = vmatpush1.xpose.msra.mxu0 0.0
  %530 = vmatprep.subr.mxu0 0.0
  %531 = vmatpush1.xpose.msra.mxu0 0.0
  %532 = vmatprep.subr.mxu0 0.0
  %533 = vmatpush1.xpose.msra.mxu0 0.0
  %534 = vmatprep.subr.mxu0 0.0
  %535 = vmatpush1.xpose.msra.mxu0 0.0
  %536 = vmatprep.subr.mxu0 0.0
  %537 = vmatpush1.xpose.msra.mxu0 0.0
  %538 = vmatprep.subr.mxu0 0.0
  %539 = vmatpush1.xpose.msra.mxu0 0.0
  %540 = vmatprep.subr.mxu0 0.0
  %541 = vmatpush1.xpose.msra.mxu0 0.0
  %542 = vmatprep.subr.mxu0 0.0
  %543 = vmatpush1.xpose.msra.mxu0 0.0
  %544 = vmatprep.subr.mxu0 0.0
  %545 = vmatpush1.xpose.msra.mxu0 0.0
  %546 = vmatprep.subr.mxu0 0.0
  %547 = vmatpush1.xpose.msra.mxu0 0.0
  %548 = vmatprep.subr.mxu0 0.0
  %549 = vmatpush1.xpose.msra.mxu0 0.0
  %550 = vmatprep.subr.mxu0 0.0
  %551 = vmatpush1.xpose.msra.mxu0 0.0
  %552 = vmatprep.subr.mxu0 0.0
  %553 = vmatpush1.xpose.msra.mxu0 0.0
  %554 = vmatprep.subr.mxu0 0.0
  %555 = vmatpush1.xpose.msra.mxu0 0.0
  %556 = vmatprep.subr.mxu0 0.0
  %557 = vmatpush1.xpose.msra.mxu0 0.0
  %558 = vmatprep.subr.mxu0 0.0
  %559 = vmatpush1.xpose.msra.mxu0 0.0
  %560 = vmatprep.subr.mxu0 0.0
  %561 = vmatpush1.xpose.msra.mxu0 0.0
  %562 = vmatprep.subr.mxu0 0.0
  %563 = vmatpush1.xpose.msra.mxu0 0.0
  %564 = vmatprep.subr.mxu0 0.0
  %565 = vmatpush1.xpose.msra.mxu0 0.0
  %566 = vmatprep.subr.mxu0 0.0
  %567 = vmatpush1.xpose.msra.mxu0 0.0
  %568 = vmatprep.subr.mxu0 0.0
  %569 = vmatpush1.xpose.msra.mxu0 0.0
  %570 = vmatprep.subr.mxu0 0.0
  %571 = vmatpush1.xpose.msra.mxu0 0.0
  %572 = vmatprep.subr.mxu0 0.0
  %573 = vmatpush1.xpose.msra.mxu0 0.0
  %574 = vmatprep.subr.mxu0 0.0
  %575 = vmatpush1.xpose.msra.mxu0 0.0
  %576 = vmatprep.subr.mxu0 0.0
  %577 = vmatpush1.xpose.msra.mxu0 0.0
  %578 = vmatprep.subr.mxu0 0.0
  %579 = vmatpush1.xpose.msra.mxu0 0.0
  %580 = vmatprep.subr.mxu0 0.0
  %581 = vmatpush1.xpose.msra.mxu0 0.0
  %582 = vmatprep.subr.mxu0 0.0
  %583 = vmatpush1.xpose.msra.mxu0 0.0
  %584 = vmatprep.subr.mxu0 0.0
  %585 = vmatpush1.xpose.msra.mxu0 0.0
  %586 = vmatprep.subr.mxu0 0.0
  %587 = vmatpush1.xpose.msra.mxu0 0.0
  %588 = vmatprep.mubr.f32.mxu0 0.0
  %589 = vmatmul.mubr.f32.gmra.mrb[0].mxu0 %v520
  %v590 = vpop.f32.mrb[0].mxu0
  %v591 = vadd.f32 0.0, %v590
  %v592 = vpop.f32.mrb[0].mxu0
  %593 = vdwg.mxu0
  %v594 = vmul.f32 %v513, 0.35355338
  %v595 = vmul.f32 %v591, 0.35355338
  %v596 = vsel %vm110, %v594, -inf
  %597 = vmax.xlane.f32.xlu0 %v596
  %v598 = vpop.xlane.xlu0 %597
  %v599 = vsel %vm110, %v595, -inf
  %600 = vmax.xlane.f32.xlu0 %v599
  %v601 = vpop.xlane.xlu0 %600
  %v602 = vsub.f32 %v594, %v598
  %v603 = vsub.f32 %v595, %v601
  %v604 = vmul.f32 %v602, 1.442695
  %v605 = vpow.pop %v604
  %v606 = vmul.f32 %v603, 1.442695
  %v607 = vpow.pop %v606
  %v608 = vsel %vm110, %v605, 0.0
  %609 = vadd.xlane.f32.xlu0 %v608
  %v610 = vpop.xlane.xlu0 %609
  %v611 = vsel %vm110, %v607, 0.0
  %612 = vadd.xlane.f32.xlu0 %v611
  %v613 = vpop.xlane.xlu0 %612
  %v614 = vrcp.pop %v610
  %v615 = vmul.f32 %v605, %v614
  %v616 = vrcp.pop %v613
  %v617 = vmul.f32 %v607, %v616
  %618 = vrot.lane.b32.xlu0 %v99, 56
  %v619 = vpop.permute.xlu0 %618
  %v622 = vsel %vm110, %v615, 0
  %624 = vmatprep.subr.mxu0 0.0
  %625 = vmatpush1.msra.mxu0 %v619
  %626 = vmatprep.subr.mxu0 0.0
  %627 = vmatpush1.msra.mxu0 0.0
  %628 = vmatprep.subr.mxu0 0.0
  %629 = vmatpush1.msra.mxu0 0.0
  %630 = vmatprep.subr.mxu0 0.0
  %631 = vmatpush1.msra.mxu0 0.0
  %632 = vmatprep.subr.mxu0 0.0
  %633 = vmatpush1.msra.mxu0 0.0
  %634 = vmatprep.subr.mxu0 0.0
  %635 = vmatpush1.msra.mxu0 0.0
  %636 = vmatprep.subr.mxu0 0.0
  %637 = vmatpush1.msra.mxu0 0.0
  %638 = vmatprep.subr.mxu0 0.0
  %639 = vmatpush1.msra.mxu0 0.0
  %640 = vmatprep.subr.mxu0 0.0
  %641 = vmatpush1.msra.mxu0 0.0
  %642 = vmatprep.subr.mxu0 0.0
  %643 = vmatpush1.msra.mxu0 0.0
  %644 = vmatprep.subr.mxu0 0.0
  %645 = vmatpush1.msra.mxu0 0.0
  %646 = vmatprep.subr.mxu0 0.0
  %647 = vmatpush1.msra.mxu0 0.0
  %648 = vmatprep.subr.mxu0 0.0
  %649 = vmatpush1.msra.mxu0 0.0
  %650 = vmatprep.subr.mxu0 0.0
  %651 = vmatpush1.msra.mxu0 0.0
  %652 = vmatprep.subr.mxu0 0.0
  %653 = vmatpush1.msra.mxu0 0.0
  %654 = vmatprep.subr.mxu0 0.0
  %655 = vmatpush1.msra.mxu0 0.0
  %656 = vmatprep.subr.mxu0 0.0
  %657 = vmatpush1.msra.mxu0 0.0
  %658 = vmatprep.subr.mxu0 0.0
  %659 = vmatpush1.msra.mxu0 0.0
  %660 = vmatprep.subr.mxu0 0.0
  %661 = vmatpush1.msra.mxu0 0.0
  %662 = vmatprep.subr.mxu0 0.0
  %663 = vmatpush1.msra.mxu0 0.0
  %664 = vmatprep.subr.mxu0 0.0
  %665 = vmatpush1.msra.mxu0 0.0
  %666 = vmatprep.subr.mxu0 0.0
  %667 = vmatpush1.msra.mxu0 0.0
  %668 = vmatprep.subr.mxu0 0.0
  %669 = vmatpush1.msra.mxu0 0.0
  %670 = vmatprep.subr.mxu0 0.0
  %671 = vmatpush1.msra.mxu0 0.0
  %672 = vmatprep.subr.mxu0 0.0
  %673 = vmatpush1.msra.mxu0 0.0
  %674 = vmatprep.subr.mxu0 0.0
  %675 = vmatpush1.msra.mxu0 0.0
  %676 = vmatprep.subr.mxu0 0.0
  %677 = vmatpush1.msra.mxu0 0.0
  %678 = vmatprep.subr.mxu0 0.0
  %679 = vmatpush1.msra.mxu0 0.0
  %680 = vmatprep.subr.mxu0 0.0
  %681 = vmatpush1.msra.mxu0 0.0
  %682 = vmatprep.subr.mxu0 0.0
  %683 = vmatpush1.msra.mxu0 0.0
  %684 = vmatprep.subr.mxu0 0.0
  %685 = vmatpush1.msra.mxu0 0.0
  %686 = vmatprep.subr.mxu0 0.0
  %687 = vmatpush1.msra.mxu0 0.0
  %688 = vmatprep.mubr.f32.mxu0 0.0
  %689 = vmatmul.mubr.f32.gmra.mrb[0].mxu0 %v622
  %v690 = vpop.f32.mrb[0].mxu0
  %v691 = vadd.f32 0.0, %v690
  %v692 = vpop.f32.mrb[0].mxu0
  %693 = vdwg.mxu0
  %694 = vrot.lane.b32.xlu0 %v104, 56
  %v695 = vpop.permute.xlu0 %694
  %v698 = vsel %vm110, %v617, 0
  %700 = vmatprep.subr.mxu0 0.0
  %701 = vmatpush1.msra.mxu0 %v695
  %702 = vmatprep.subr.mxu0 0.0
  %703 = vmatpush1.msra.mxu0 0.0
  %704 = vmatprep.subr.mxu0 0.0
  %705 = vmatpush1.msra.mxu0 0.0
  %706 = vmatprep.subr.mxu0 0.0
  %707 = vmatpush1.msra.mxu0 0.0
  %708 = vmatprep.subr.mxu0 0.0
  %709 = vmatpush1.msra.mxu0 0.0
  %710 = vmatprep.subr.mxu0 0.0
  %711 = vmatpush1.msra.mxu0 0.0
  %712 = vmatprep.subr.mxu0 0.0
  %713 = vmatpush1.msra.mxu0 0.0
  %714 = vmatprep.subr.mxu0 0.0
  %715 = vmatpush1.msra.mxu0 0.0
  %716 = vmatprep.subr.mxu0 0.0
  %717 = vmatpush1.msra.mxu0 0.0
  %718 = vmatprep.subr.mxu0 0.0
  %719 = vmatpush1.msra.mxu0 0.0
  %720 = vmatprep.subr.mxu0 0.0
  %721 = vmatpush1.msra.mxu0 0.0
  %722 = vmatprep.subr.mxu0 0.0
  %723 = vmatpush1.msra.mxu0 0.0
  %724 = vmatprep.subr.mxu0 0.0
  %725 = vmatpush1.msra.mxu0 0.0
  %726 = vmatprep.subr.mxu0 0.0
  %727 = vmatpush1.msra.mxu0 0.0
  %728 = vmatprep.subr.mxu0 0.0
  %729 = vmatpush1.msra.mxu0 0.0
  %730 = vmatprep.subr.mxu0 0.0
  %731 = vmatpush1.msra.mxu0 0.0
  %732 = vmatprep.subr.mxu0 0.0
  %733 = vmatpush1.msra.mxu0 0.0
  %734 = vmatprep.subr.mxu0 0.0
  %735 = vmatpush1.msra.mxu0 0.0
  %736 = vmatprep.subr.mxu0 0.0
  %737 = vmatpush1.msra.mxu0 0.0
  %738 = vmatprep.subr.mxu0 0.0
  %739 = vmatpush1.msra.mxu0 0.0
  %740 = vmatprep.subr.mxu0 0.0
  %741 = vmatpush1.msra.mxu0 0.0
  %742 = vmatprep.subr.mxu0 0.0
  %743 = vmatpush1.msra.mxu0 0.0
  %744 = vmatprep.subr.mxu0 0.0
  %745 = vmatpush1.msra.mxu0 0.0
  %746 = vmatprep.subr.mxu0 0.0
  %747 = vmatpush1.msra.mxu0 0.0
  %748 = vmatprep.subr.mxu0 0.0
  %749 = vmatpush1.msra.mxu0 0.0
  %750 = vmatprep.subr.mxu0 0.0
  %751 = vmatpush1.msra.mxu0 0.0
  %752 = vmatprep.subr.mxu0 0.0
  %753 = vmatpush1.msra.mxu0 0.0
  %754 = vmatprep.subr.mxu0 0.0
  %755 = vmatpush1.msra.mxu0 0.0
  %756 = vmatprep.subr.mxu0 0.0
  %757 = vmatpush1.msra.mxu0 0.0
  %758 = vmatprep.subr.mxu0 0.0
  %759 = vmatpush1.msra.mxu0 0.0
  %760 = vmatprep.subr.mxu0 0.0
  %761 = vmatpush1.msra.mxu0 0.0
  %762 = vmatprep.subr.mxu0 0.0
  %763 = vmatpush1.msra.mxu0 0.0
  %764 = vmatprep.mubr.f32.mxu0 0.0
  %765 = vmatmul.mubr.f32.gmra.mrb[0].mxu0 %v698
  %v766 = vpop.f32.mrb[0].mxu0
  %v767 = vadd.f32 0.0, %v766
  %v768 = vpop.f32.mrb[0].mxu0
  %769 = vdwg.mxu0
  %771 = vrot.lane.b32.xlu0 %v17, 32
  %v772 = vpop.permute.xlu0 %771
  %v775 = vsel %vm110, %v691, 0
  %v778 = vsel %vm110, %v767, 0
  %780 = vmatprep.subr.mxu0 0.0
  %781 = vmatpush1.msra.mxu0 %v772
  %782 = vmatprep.subr.mxu0 0.0
  %783 = vmatpush1.msra.mxu0 0.0
  %784 = vmatprep.subr.mxu0 0.0
  %785 = vmatpush1.msra.mxu0 0.0
  %786 = vmatprep.subr.mxu0 0.0
  %787 = vmatpush1.msra.mxu0 0.0
  %788 = vmatprep.subr.mxu0 0.0
  %789 = vmatpush1.msra.mxu0 0.0
  %790 = vmatprep.subr.mxu0 0.0
  %791 = vmatpush1.msra.mxu0 0.0
  %792 = vmatprep.subr.mxu0 0.0
  %793 = vmatpush1.msra.mxu0 0.0
  %794 = vmatprep.subr.mxu0 0.0
  %795 = vmatpush1.msra.mxu0 0.0
  %796 = vmatprep.subr.mxu0 0.0
  %797 = vmatpush1.msra.mxu0 0.0
  %798 = vmatprep.subr.mxu0 0.0
  %799 = vmatpush1.msra.mxu0 0.0
  %800 = vmatprep.subr.mxu0 0.0
  %801 = vmatpush1.msra.mxu0 0.0
  %802 = vmatprep.subr.mxu0 0.0
  %803 = vmatpush1.msra.mxu0 0.0
  %804 = vmatprep.subr.mxu0 0.0
  %805 = vmatpush1.msra.mxu0 0.0
  %806 = vmatprep.subr.mxu0 0.0
  %807 = vmatpush1.msra.mxu0 0.0
  %808 = vmatprep.subr.mxu0 0.0
  %809 = vmatpush1.msra.mxu0 0.0
  %810 = vmatprep.subr.mxu0 0.0
  %811 = vmatpush1.msra.mxu0 0.0
  %812 = vmatprep.subr.mxu0 0.0
  %813 = vmatpush1.msra.mxu0 0.0
  %814 = vmatprep.subr.mxu0 0.0
  %815 = vmatpush1.msra.mxu0 0.0
  %816 = vmatprep.subr.mxu0 0.0
  %817 = vmatpush1.msra.mxu0 0.0
  %818 = vmatprep.subr.mxu0 0.0
  %819 = vmatpush1.msra.mxu0 0.0
  %820 = vmatprep.subr.mxu0 0.0
  %821 = vmatpush1.msra.mxu0 0.0
  %822 = vmatprep.subr.mxu0 0.0
  %823 = vmatpush1.msra.mxu0 0.0
  %824 = vmatprep.subr.mxu0 0.0
  %825 = vmatpush1.msra.mxu0 0.0
  %826 = vmatprep.subr.mxu0 0.0
  %827 = vmatpush1.msra.mxu0 0.0
  %828 = vmatprep.subr.mxu0 0.0
  %829 = vmatpush1.msra.mxu0 0.0
  %830 = vmatprep.subr.mxu0 0.0
  %831 = vmatpush1.msra.mxu0 0.0
  %832 = vmatprep.subr.mxu0 0.0
  %833 = vmatpush1.msra.mxu0 0.0
  %834 = vmatprep.subr.mxu0 0.0
  %835 = vmatpush1.msra.mxu0 0.0
  %836 = vmatprep.subr.mxu0 0.0
  %837 = vmatpush1.msra.mxu0 0.0
  %838 = vmatprep.subr.mxu0 0.0
  %839 = vmatpush1.msra.mxu0 0.0
  %840 = vmatprep.subr.mxu0 0.0
  %841 = vmatpush1.msra.mxu0 0.0
  %842 = vmatprep.subr.mxu0 0.0
  %843 = vmatpush1.msra.mxu0 0.0
  %844 = vmatprep.mubr.f32.mxu0 0.0
  %845 = vmatmul.mubr.f32.gmra.mrb[0].mxu0 %v775
  %v846 = vpop.f32.mrb[0].mxu0
  %v847 = vadd.f32 0.0, %v846
  %v848 = vpop.f32.mrb[0].mxu0
  %849 = vmatprep.mubr.f32.mxu0 0.0
  %850 = vmatmul.mubr.f32.gmra.mrb[0].mxu0 %v778
  %v851 = vpop.f32.mrb[0].mxu0
  %v852 = vadd.f32 0.0, %v851
  %v853 = vpop.f32.mrb[0].mxu0
  %854 = vdwg.mxu0
  %856 = vrot.lane.b32.xlu0 %v16, 32
  %v857 = vpop.permute.xlu0 %856
  %v860 = vsel %vm110, %v359, 0
  %v863 = vsel %vm110, %v435, 0
  %865 = vmatprep.subr.mxu0 0.0
  %866 = vmatpush1.msra.mxu0 %v857
  %867 = vmatprep.subr.mxu0 0.0
  %868 = vmatpush1.msra.mxu0 0.0
  %869 = vmatprep.subr.mxu0 0.0
  %870 = vmatpush1.msra.mxu0 0.0
  %871 = vmatprep.subr.mxu0 0.0
  %872 = vmatpush1.msra.mxu0 0.0
  %873 = vmatprep.subr.mxu0 0.0
  %874 = vmatpush1.msra.mxu0 0.0
  %875 = vmatprep.subr.mxu0 0.0
  %876 = vmatpush1.msra.mxu0 0.0
  %877 = vmatprep.subr.mxu0 0.0
  %878 = vmatpush1.msra.mxu0 0.0
  %879 = vmatprep.subr.mxu0 0.0
  %880 = vmatpush1.msra.mxu0 0.0
  %881 = vmatprep.subr.mxu0 0.0
  %882 = vmatpush1.msra.mxu0 0.0
  %883 = vmatprep.subr.mxu0 0.0
  %884 = vmatpush1.msra.mxu0 0.0
  %885 = vmatprep.subr.mxu0 0.0
  %886 = vmatpush1.msra.mxu0 0.0
  %887 = vmatprep.subr.mxu0 0.0
  %888 = vmatpush1.msra.mxu0 0.0
  %889 = vmatprep.subr.mxu0 0.0
  %890 = vmatpush1.msra.mxu0 0.0
  %891 = vmatprep.subr.mxu0 0.0
  %892 = vmatpush1.msra.mxu0 0.0
  %893 = vmatprep.subr.mxu0 0.0
  %894 = vmatpush1.msra.mxu0 0.0
  %895 = vmatprep.subr.mxu0 0.0
  %896 = vmatpush1.msra.mxu0 0.0
  %897 = vmatprep.subr.mxu0 0.0
  %898 = vmatpush1.msra.mxu0 0.0
  %899 = vmatprep.subr.mxu0 0.0
  %900 = vmatpush1.msra.mxu0 0.0
  %901 = vmatprep.subr.mxu0 0.0
  %902 = vmatpush1.msra.mxu0 0.0
  %903 = vmatprep.subr.mxu0 0.0
  %904 = vmatpush1.msra.mxu0 0.0
  %905 = vmatprep.subr.mxu0 0.0
  %906 = vmatpush1.msra.mxu0 0.0
  %907 = vmatprep.subr.mxu0 0.0
  %908 = vmatpush1.msra.mxu0 0.0
  %909 = vmatprep.subr.mxu0 0.0
  %910 = vmatpush1.msra.mxu0 0.0
  %911 = vmatprep.subr.mxu0 0.0
  %912 = vmatpush1.msra.mxu0 0.0
  %913 = vmatprep.subr.mxu0 0.0
  %914 = vmatpush1.msra.mxu0 0.0
  %915 = vmatprep.subr.mxu0 0.0
  %916 = vmatpush1.msra.mxu0 0.0
  %917 = vmatprep.subr.mxu0 0.0
  %918 = vmatpush1.msra.mxu0 0.0
  %919 = vmatprep.subr.mxu0 0.0
  %920 = vmatpush1.msra.mxu0 0.0
  %921 = vmatprep.subr.mxu0 0.0
  %922 = vmatpush1.msra.mxu0 0.0
  %923 = vmatprep.subr.mxu0 0.0
  %924 = vmatpush1.msra.mxu0 0.0
  %925 = vmatprep.subr.mxu0 0.0
  %926 = vmatpush1.msra.mxu0 0.0
  %927 = vmatprep.subr.mxu0 0.0
  %928 = vmatpush1.msra.mxu0 0.0
  %929 = vmatprep.mubr.f32.mxu0 0.0
  %930 = vmatmul.mubr.f32.gmra.mrb[0].mxu0 %v860
  %v931 = vpop.f32.mrb[0].mxu0
  %v932 = vadd.f32 %v847, %v931
  %v933 = vpop.f32.mrb[0].mxu0
  %934 = vmatprep.mubr.f32.mxu0 0.0
  %935 = vmatmul.mubr.f32.gmra.mrb[0].mxu0 %v863
  %v936 = vpop.f32.mrb[0].mxu0
  %v937 = vadd.f32 %v852, %v936
  %v938 = vpop.f32.mrb[0].mxu0
  %939 = vdwg.mxu0
  %940 = vrot.lane.b32.xlu0 %v99, 112
  %v941 = vpop.permute.xlu0 %940
  %942 = vrot.lane.b32.xlu0 %v99, 80
  %v943 = vpop.permute.xlu0 %942
  %v944 = vsel %vm110, %v941, 0
  %v946 = vsel %vm110, %v943, 0
  %948 = vmatprep.subr.mxu0 0.0
  %949 = vmatpush1.xpose.msra.mxu0 %v946
  %950 = vmatprep.subr.mxu0 0.0
  %951 = vmatpush1.xpose.msra.mxu0 0.0
  %952 = vmatprep.subr.mxu0 0.0
  %953 = vmatpush1.xpose.msra.mxu0 0.0
  %954 = vmatprep.subr.mxu0 0.0
  %955 = vmatpush1.xpose.msra.mxu0 0.0
  %956 = vmatprep.subr.mxu0 0.0
  %957 = vmatpush1.xpose.msra.mxu0 0.0
  %958 = vmatprep.subr.mxu0 0.0
  %959 = vmatpush1.xpose.msra.mxu0 0.0
  %960 = vmatprep.subr.mxu0 0.0
  %961 = vmatpush1.xpose.msra.mxu0 0.0
  %962 = vmatprep.subr.mxu0 0.0
  %963 = vmatpush1.xpose.msra.mxu0 0.0
  %964 = vmatprep.subr.mxu0 0.0
  %965 = vmatpush1.xpose.msra.mxu0 0.0
  %966 = vmatprep.subr.mxu0 0.0
  %967 = vmatpush1.xpose.msra.mxu0 0.0
  %968 = vmatprep.subr.mxu0 0.0
  %969 = vmatpush1.xpose.msra.mxu0 0.0
  %970 = vmatprep.subr.mxu0 0.0
  %971 = vmatpush1.xpose.msra.mxu0 0.0
  %972 = vmatprep.subr.mxu0 0.0
  %973 = vmatpush1.xpose.msra.mxu0 0.0
  %974 = vmatprep.subr.mxu0 0.0
  %975 = vmatpush1.xpose.msra.mxu0 0.0
  %976 = vmatprep.subr.mxu0 0.0
  %977 = vmatpush1.xpose.msra.mxu0 0.0
  %978 = vmatprep.subr.mxu0 0.0
  %979 = vmatpush1.xpose.msra.mxu0 0.0
  %980 = vmatprep.subr.mxu0 0.0
  %981 = vmatpush1.xpose.msra.mxu0 0.0
  %982 = vmatprep.subr.mxu0 0.0
  %983 = vmatpush1.xpose.msra.mxu0 0.0
  %984 = vmatprep.subr.mxu0 0.0
  %985 = vmatpush1.xpose.msra.mxu0 0.0
  %986 = vmatprep.subr.mxu0 0.0
  %987 = vmatpush1.xpose.msra.mxu0 0.0
  %988 = vmatprep.subr.mxu0 0.0
  %989 = vmatpush1.xpose.msra.mxu0 0.0
  %990 = vmatprep.subr.mxu0 0.0
  %991 = vmatpush1.xpose.msra.mxu0 0.0
  %992 = vmatprep.subr.mxu0 0.0
  %993 = vmatpush1.xpose.msra.mxu0 0.0
  %994 = vmatprep.subr.mxu0 0.0
  %995 = vmatpush1.xpose.msra.mxu0 0.0
  %996 = vmatprep.subr.mxu0 0.0
  %997 = vmatpush1.xpose.msra.mxu0 0.0
  %998 = vmatprep.subr.mxu0 0.0
  %999 = vmatpush1.xpose.msra.mxu0 0.0
  %1000 = vmatprep.subr.mxu0 0.0
  %1001 = vmatpush1.xpose.msra.mxu0 0.0
  %1002 = vmatprep.subr.mxu0 0.0
  %1003 = vmatpush1.xpose.msra.mxu0 0.0
  %1004 = vmatprep.subr.mxu0 0.0
  %1005 = vmatpush1.xpose.msra.mxu0 0.0
  %1006 = vmatprep.subr.mxu0 0.0
  %1007 = vmatpush1.xpose.msra.mxu0 0.0
  %1008 = vmatprep.subr.mxu0 0.0
  %1009 = vmatpush1.xpose.msra.mxu0 0.0
  %1010 = vmatprep.subr.mxu0 0.0
  %1011 = vmatpush1.xpose.msra.mxu0 0.0
  %1012 = vmatprep.mubr.f32.mxu0 0.0
  %1013 = vmatmul.mubr.f32.gmra.mrb[0].mxu0 %v944
  %v1014 = vpop.f32.mrb[0].mxu0
  %v1015 = vadd.f32 0.0, %v1014
  %v1016 = vpop.f32.mrb[0].mxu0
  %1017 = vdwg.mxu0
  %1018 = vrot.lane.b32.xlu0 %v104, 112
  %v1019 = vpop.permute.xlu0 %1018
  %1020 = vrot.lane.b32.xlu0 %v104, 80
  %v1021 = vpop.permute.xlu0 %1020
  %v1022 = vsel %vm110, %v1019, 0
  %v1024 = vsel %vm110, %v1021, 0
  %1026 = vmatprep.subr.mxu0 0.0
  %1027 = vmatpush1.xpose.msra.mxu0 %v1024
  %1028 = vmatprep.subr.mxu0 0.0
  %1029 = vmatpush1.xpose.msra.mxu0 0.0
  %1030 = vmatprep.subr.mxu0 0.0
  %1031 = vmatpush1.xpose.msra.mxu0 0.0
  %1032 = vmatprep.subr.mxu0 0.0
  %1033 = vmatpush1.xpose.msra.mxu0 0.0
  %1034 = vmatprep.subr.mxu0 0.0
  %1035 = vmatpush1.xpose.msra.mxu0 0.0
  %1036 = vmatprep.subr.mxu0 0.0
  %1037 = vmatpush1.xpose.msra.mxu0 0.0
  %1038 = vmatprep.subr.mxu0 0.0
  %1039 = vmatpush1.xpose.msra.mxu0 0.0
  %1040 = vmatprep.subr.mxu0 0.0
  %1041 = vmatpush1.xpose.msra.mxu0 0.0
  %1042 = vmatprep.subr.mxu0 0.0
  %1043 = vmatpush1.xpose.msra.mxu0 0.0
  %1044 = vmatprep.subr.mxu0 0.0
  %1045 = vmatpush1.xpose.msra.mxu0 0.0
  %1046 = vmatprep.subr.mxu0 0.0
  %1047 = vmatpush1.xpose.msra.mxu0 0.0
  %1048 = vmatprep.subr.mxu0 0.0
  %1049 = vmatpush1.xpose.msra.mxu0 0.0
  %1050 = vmatprep.subr.mxu0 0.0
  %1051 = vmatpush1.xpose.msra.mxu0 0.0
  %1052 = vmatprep.subr.mxu0 0.0
  %1053 = vmatpush1.xpose.msra.mxu0 0.0
  %1054 = vmatprep.subr.mxu0 0.0
  %1055 = vmatpush1.xpose.msra.mxu0 0.0
  %1056 = vmatprep.subr.mxu0 0.0
  %1057 = vmatpush1.xpose.msra.mxu0 0.0
  %1058 = vmatprep.subr.mxu0 0.0
  %1059 = vmatpush1.xpose.msra.mxu0 0.0
  %1060 = vmatprep.subr.mxu0 0.0
  %1061 = vmatpush1.xpose.msra.mxu0 0.0
  %1062 = vmatprep.subr.mxu0 0.0
  %1063 = vmatpush1.xpose.msra.mxu0 0.0
  %1064 = vmatprep.subr.mxu0 0.0
  %1065 = vmatpush1.xpose.msra.mxu0 0.0
  %1066 = vmatprep.subr.mxu0 0.0
  %1067 = vmatpush1.xpose.msra.mxu0 0.0
  %1068 = vmatprep.subr.mxu0 0.0
  %1069 = vmatpush1.xpose.msra.mxu0 0.0
  %1070 = vmatprep.subr.mxu0 0.0
  %1071 = vmatpush1.xpose.msra.mxu0 0.0
  %1072 = vmatprep.subr.mxu0 0.0
  %1073 = vmatpush1.xpose.msra.mxu0 0.0
  %1074 = vmatprep.subr.mxu0 0.0
  %1075 = vmatpush1.xpose.msra.mxu0 0.0
  %1076 = vmatprep.subr.mxu0 0.0
  %1077 = vmatpush1.xpose.msra.mxu0 0.0
  %1078 = vmatprep.subr.mxu0 0.0
  %1079 = vmatpush1.xpose.msra.mxu0 0.0
  %1080 = vmatprep.subr.mxu0 0.0
  %1081 = vmatpush1.xpose.msra.mxu0 0.0
  %1082 = vmatprep.subr.mxu0 0.0
  %1083 = vmatpush1.xpose.msra.mxu0 0.0
  %1084 = vmatprep.subr.mxu0 0.0
  %1085 = vmatpush1.xpose.msra.mxu0 0.0
  %1086 = vmatprep.subr.mxu0 0.0
  %1087 = vmatpush1.xpose.msra.mxu0 0.0
  %1088 = vmatprep.subr.mxu0 0.0
  %1089 = vmatpush1.xpose.msra.mxu0 0.0
  %1090 = vmatprep.mubr.f32.mxu0 0.0
  %1091 = vmatmul.mubr.f32.gmra.mrb[0].mxu0 %v1022
  %v1092 = vpop.f32.mrb[0].mxu0
  %v1093 = vadd.f32 0.0, %v1092
  %v1094 = vpop.f32.mrb[0].mxu0
  %1095 = vdwg.mxu0
  %v1096 = vmul.f32 %v1015, 0.35355338
  %v1097 = vmul.f32 %v1093, 0.35355338
  %v1098 = vsel %vm110, %v1096, -inf
  %1099 = vmax.xlane.f32.xlu0 %v1098
  %v1100 = vpop.xlane.xlu0 %1099
  %v1101 = vsel %vm110, %v1097, -inf
  %1102 = vmax.xlane.f32.xlu0 %v1101
  %v1103 = vpop.xlane.xlu0 %1102
  %v1104 = vsub.f32 %v1096, %v1100
  %v1105 = vsub.f32 %v1097, %v1103
  %v1106 = vmul.f32 %v1104, 1.442695
  %v1107 = vpow.pop %v1106
  %v1108 = vmul.f32 %v1105, 1.442695
  %v1109 = vpow.pop %v1108
  %v1110 = vsel %vm110, %v1107, 0.0
  %1111 = vadd.xlane.f32.xlu0 %v1110
  %v1112 = vpop.xlane.xlu0 %1111
  %v1113 = vsel %vm110, %v1109, 0.0
  %1114 = vadd.xlane.f32.xlu0 %v1113
  %v1115 = vpop.xlane.xlu0 %1114
  %v1116 = vrcp.pop %v1112
  %v1117 = vmul.f32 %v1107, %v1116
  %v1118 = vrcp.pop %v1115
  %v1119 = vmul.f32 %v1109, %v1118
  %1120 = vrot.lane.b32.xlu0 %v99, 48
  %v1121 = vpop.permute.xlu0 %1120
  %v1124 = vsel %vm110, %v1117, 0
  %1126 = vmatprep.subr.mxu0 0.0
  %1127 = vmatpush1.msra.mxu0 %v1121
  %1128 = vmatprep.subr.mxu0 0.0
  %1129 = vmatpush1.msra.mxu0 0.0
  %1130 = vmatprep.subr.mxu0 0.0
  %1131 = vmatpush1.msra.mxu0 0.0
  %1132 = vmatprep.subr.mxu0 0.0
  %1133 = vmatpush1.msra.mxu0 0.0
  %1134 = vmatprep.subr.mxu0 0.0
  %1135 = vmatpush1.msra.mxu0 0.0
  %1136 = vmatprep.subr.mxu0 0.0
  %1137 = vmatpush1.msra.mxu0 0.0
  %1138 = vmatprep.subr.mxu0 0.0
  %1139 = vmatpush1.msra.mxu0 0.0
  %1140 = vmatprep.subr.mxu0 0.0
  %1141 = vmatpush1.msra.mxu0 0.0
  %1142 = vmatprep.subr.mxu0 0.0
  %1143 = vmatpush1.msra.mxu0 0.0
  %1144 = vmatprep.subr.mxu0 0.0
  %1145 = vmatpush1.msra.mxu0 0.0
  %1146 = vmatprep.subr.mxu0 0.0
  %1147 = vmatpush1.msra.mxu0 0.0
  %1148 = vmatprep.subr.mxu0 0.0
  %1149 = vmatpush1.msra.mxu0 0.0
  %1150 = vmatprep.subr.mxu0 0.0
  %1151 = vmatpush1.msra.mxu0 0.0
  %1152 = vmatprep.subr.mxu0 0.0
  %1153 = vmatpush1.msra.mxu0 0.0
  %1154 = vmatprep.subr.mxu0 0.0
  %1155 = vmatpush1.msra.mxu0 0.0
  %1156 = vmatprep.subr.mxu0 0.0
  %1157 = vmatpush1.msra.mxu0 0.0
  %1158 = vmatprep.subr.mxu0 0.0
  %1159 = vmatpush1.msra.mxu0 0.0
  %1160 = vmatprep.subr.mxu0 0.0
  %1161 = vmatpush1.msra.mxu0 0.0
  %1162 = vmatprep.subr.mxu0 0.0
  %1163 = vmatpush1.msra.mxu0 0.0
  %1164 = vmatprep.subr.mxu0 0.0
  %1165 = vmatpush1.msra.mxu0 0.0
  %1166 = vmatprep.subr.mxu0 0.0
  %1167 = vmatpush1.msra.mxu0 0.0
  %1168 = vmatprep.subr.mxu0 0.0
  %1169 = vmatpush1.msra.mxu0 0.0
  %1170 = vmatprep.subr.mxu0 0.0
  %1171 = vmatpush1.msra.mxu0 0.0
  %1172 = vmatprep.subr.mxu0 0.0
  %1173 = vmatpush1.msra.mxu0 0.0
  %1174 = vmatprep.subr.mxu0 0.0
  %1175 = vmatpush1.msra.mxu0 0.0
  %1176 = vmatprep.subr.mxu0 0.0
  %1177 = vmatpush1.msra.mxu0 0.0
  %1178 = vmatprep.subr.mxu0 0.0
  %1179 = vmatpush1.msra.mxu0 0.0
  %1180 = vmatprep.subr.mxu0 0.0
  %1181 = vmatpush1.msra.mxu0 0.0
  %1182 = vmatprep.subr.mxu0 0.0
  %1183 = vmatpush1.msra.mxu0 0.0
  %1184 = vmatprep.subr.mxu0 0.0
  %1185 = vmatpush1.msra.mxu0 0.0
  %1186 = vmatprep.subr.mxu0 0.0
  %1187 = vmatpush1.msra.mxu0 0.0
  %1188 = vmatprep.subr.mxu0 0.0
  %1189 = vmatpush1.msra.mxu0 0.0
  %1190 = vmatprep.mubr.f32.mxu0 0.0
  %1191 = vmatmul.mubr.f32.gmra.mrb[0].mxu0 %v1124
  %v1192 = vpop.f32.mrb[0].mxu0
  %v1193 = vadd.f32 0.0, %v1192
  %v1194 = vpop.f32.mrb[0].mxu0
  %1195 = vdwg.mxu0
  %1196 = vrot.lane.b32.xlu0 %v104, 48
  %v1197 = vpop.permute.xlu0 %1196
  %v1200 = vsel %vm110, %v1119, 0
  %1202 = vmatprep.subr.mxu0 0.0
  %1203 = vmatpush1.msra.mxu0 %v1197
  %1204 = vmatprep.subr.mxu0 0.0
  %1205 = vmatpush1.msra.mxu0 0.0
  %1206 = vmatprep.subr.mxu0 0.0
  %1207 = vmatpush1.msra.mxu0 0.0
  %1208 = vmatprep.subr.mxu0 0.0
  %1209 = vmatpush1.msra.mxu0 0.0
  %1210 = vmatprep.subr.mxu0 0.0
  %1211 = vmatpush1.msra.mxu0 0.0
  %1212 = vmatprep.subr.mxu0 0.0
  %1213 = vmatpush1.msra.mxu0 0.0
  %1214 = vmatprep.subr.mxu0 0.0
  %1215 = vmatpush1.msra.mxu0 0.0
  %1216 = vmatprep.subr.mxu0 0.0
  %1217 = vmatpush1.msra.mxu0 0.0
  %1218 = vmatprep.subr.mxu0 0.0
  %1219 = vmatpush1.msra.mxu0 0.0
  %1220 = vmatprep.subr.mxu0 0.0
  %1221 = vmatpush1.msra.mxu0 0.0
  %1222 = vmatprep.subr.mxu0 0.0
  %1223 = vmatpush1.msra.mxu0 0.0
  %1224 = vmatprep.subr.mxu0 0.0
  %1225 = vmatpush1.msra.mxu0 0.0
  %1226 = vmatprep.subr.mxu0 0.0
  %1227 = vmatpush1.msra.mxu0 0.0
  %1228 = vmatprep.subr.mxu0 0.0
  %1229 = vmatpush1.msra.mxu0 0.0
  %1230 = vmatprep.subr.mxu0 0.0
  %1231 = vmatpush1.msra.mxu0 0.0
  %1232 = vmatprep.subr.mxu0 0.0
  %1233 = vmatpush1.msra.mxu0 0.0
  %1234 = vmatprep.subr.mxu0 0.0
  %1235 = vmatpush1.msra.mxu0 0.0
  %1236 = vmatprep.subr.mxu0 0.0
  %1237 = vmatpush1.msra.mxu0 0.0
  %1238 = vmatprep.subr.mxu0 0.0
  %1239 = vmatpush1.msra.mxu0 0.0
  %1240 = vmatprep.subr.mxu0 0.0
  %1241 = vmatpush1.msra.mxu0 0.0
  %1242 = vmatprep.subr.mxu0 0.0
  %1243 = vmatpush1.msra.mxu0 0.0
  %1244 = vmatprep.subr.mxu0 0.0
  %1245 = vmatpush1.msra.mxu0 0.0
  %1246 = vmatprep.subr.mxu0 0.0
  %1247 = vmatpush1.msra.mxu0 0.0
  %1248 = vmatprep.subr.mxu0 0.0
  %1249 = vmatpush1.msra.mxu0 0.0
  %1250 = vmatprep.subr.mxu0 0.0
  %1251 = vmatpush1.msra.mxu0 0.0
  %1252 = vmatprep.subr.mxu0 0.0
  %1253 = vmatpush1.msra.mxu0 0.0
  %1254 = vmatprep.subr.mxu0 0.0
  %1255 = vmatpush1.msra.mxu0 0.0
  %1256 = vmatprep.subr.mxu0 0.0
  %1257 = vmatpush1.msra.mxu0 0.0
  %1258 = vmatprep.subr.mxu0 0.0
  %1259 = vmatpush1.msra.mxu0 0.0
  %1260 = vmatprep.subr.mxu0 0.0
  %1261 = vmatpush1.msra.mxu0 0.0
  %1262 = vmatprep.subr.mxu0 0.0
  %1263 = vmatpush1.msra.mxu0 0.0
  %1264 = vmatprep.subr.mxu0 0.0
  %1265 = vmatpush1.msra.mxu0 0.0
  %1266 = vmatprep.mubr.f32.mxu0 0.0
  %1267 = vmatmul.mubr.f32.gmra.mrb[0].mxu0 %v1200
  %v1268 = vpop.f32.mrb[0].mxu0
  %v1269 = vadd.f32 0.0, %v1268
  %v1270 = vpop.f32.mrb[0].mxu0
  %1271 = vdwg.mxu0
  %1273 = vrot.lane.b32.xlu0 %v18, 32
  %v1274 = vpop.permute.xlu0 %1273
  %v1277 = vsel %vm110, %v1193, 0
  %v1280 = vsel %vm110, %v1269, 0
  %1282 = vmatprep.subr.mxu0 0.0
  %1283 = vmatpush1.msra.mxu0 %v1274
  %1284 = vmatprep.subr.mxu0 0.0
  %1285 = vmatpush1.msra.mxu0 0.0
  %1286 = vmatprep.subr.mxu0 0.0
  %1287 = vmatpush1.msra.mxu0 0.0
  %1288 = vmatprep.subr.mxu0 0.0
  %1289 = vmatpush1.msra.mxu0 0.0
  %1290 = vmatprep.subr.mxu0 0.0
  %1291 = vmatpush1.msra.mxu0 0.0
  %1292 = vmatprep.subr.mxu0 0.0
  %1293 = vmatpush1.msra.mxu0 0.0
  %1294 = vmatprep.subr.mxu0 0.0
  %1295 = vmatpush1.msra.mxu0 0.0
  %1296 = vmatprep.subr.mxu0 0.0
  %1297 = vmatpush1.msra.mxu0 0.0
  %1298 = vmatprep.subr.mxu0 0.0
  %1299 = vmatpush1.msra.mxu0 0.0
  %1300 = vmatprep.subr.mxu0 0.0
  %1301 = vmatpush1.msra.mxu0 0.0
  %1302 = vmatprep.subr.mxu0 0.0
  %1303 = vmatpush1.msra.mxu0 0.0
  %1304 = vmatprep.subr.mxu0 0.0
  %1305 = vmatpush1.msra.mxu0 0.0
  %1306 = vmatprep.subr.mxu0 0.0
  %1307 = vmatpush1.msra.mxu0 0.0
  %1308 = vmatprep.subr.mxu0 0.0
  %1309 = vmatpush1.msra.mxu0 0.0
  %1310 = vmatprep.subr.mxu0 0.0
  %1311 = vmatpush1.msra.mxu0 0.0
  %1312 = vmatprep.subr.mxu0 0.0
  %1313 = vmatpush1.msra.mxu0 0.0
  %1314 = vmatprep.subr.mxu0 0.0
  %1315 = vmatpush1.msra.mxu0 0.0
  %1316 = vmatprep.subr.mxu0 0.0
  %1317 = vmatpush1.msra.mxu0 0.0
  %1318 = vmatprep.subr.mxu0 0.0
  %1319 = vmatpush1.msra.mxu0 0.0
  %1320 = vmatprep.subr.mxu0 0.0
  %1321 = vmatpush1.msra.mxu0 0.0
  %1322 = vmatprep.subr.mxu0 0.0
  %1323 = vmatpush1.msra.mxu0 0.0
  %1324 = vmatprep.subr.mxu0 0.0
  %1325 = vmatpush1.msra.mxu0 0.0
  %1326 = vmatprep.subr.mxu0 0.0
  %1327 = vmatpush1.msra.mxu0 0.0
  %1328 = vmatprep.subr.mxu0 0.0
  %1329 = vmatpush1.msra.mxu0 0.0
  %1330 = vmatprep.subr.mxu0 0.0
  %1331 = vmatpush1.msra.mxu0 0.0
  %1332 = vmatprep.subr.mxu0 0.0
  %1333 = vmatpush1.msra.mxu0 0.0
  %1334 = vmatprep.subr.mxu0 0.0
  %1335 = vmatpush1.msra.mxu0 0.0
  %1336 = vmatprep.subr.mxu0 0.0
  %1337 = vmatpush1.msra.mxu0 0.0
  %1338 = vmatprep.subr.mxu0 0.0
  %1339 = vmatpush1.msra.mxu0 0.0
  %1340 = vmatprep.subr.mxu0 0.0
  %1341 = vmatpush1.msra.mxu0 0.0
  %1342 = vmatprep.subr.mxu0 0.0
  %1343 = vmatpush1.msra.mxu0 0.0
  %1344 = vmatprep.subr.mxu0 0.0
  %1345 = vmatpush1.msra.mxu0 0.0
  %1346 = vmatprep.mubr.f32.mxu0 0.0
  %1347 = vmatmul.mubr.f32.gmra.mrb[0].mxu0 %v1277
  %v1348 = vpop.f32.mrb[0].mxu0
  %v1349 = vadd.f32 0.0, %v1348
  %v1350 = vpop.f32.mrb[0].mxu0
  %1351 = vmatprep.mubr.f32.mxu0 0.0
  %1352 = vmatmul.mubr.f32.gmra.mrb[0].mxu0 %v1280
  %v1353 = vpop.f32.mrb[0].mxu0
  %v1354 = vadd.f32 0.0, %v1353
  %v1355 = vpop.f32.mrb[0].mxu0
  %1356 = vdwg.mxu0
  %v1357 = vadd.f32 %v932, %v1349
  %v1358 = vadd.f32 %v937, %v1354
  %1359 = vrot.lane.b32.xlu0 %v99, 104
  %v1360 = vpop.permute.xlu0 %1359
  %1361 = vrot.lane.b32.xlu0 %v99, 72
  %v1362 = vpop.permute.xlu0 %1361
  %v1363 = vsel %vm110, %v1360, 0
  %v1365 = vsel %vm110, %v1362, 0
  %1367 = vmatprep.subr.mxu0 0.0
  %1368 = vmatpush1.xpose.msra.mxu0 %v1365
  %1369 = vmatprep.subr.mxu0 0.0
  %1370 = vmatpush1.xpose.msra.mxu0 0.0
  %1371 = vmatprep.subr.mxu0 0.0
  %1372 = vmatpush1.xpose.msra.mxu0 0.0
  %1373 = vmatprep.subr.mxu0 0.0
  %1374 = vmatpush1.xpose.msra.mxu0 0.0
  %1375 = vmatprep.subr.mxu0 0.0
  %1376 = vmatpush1.xpose.msra.mxu0 0.0
  %1377 = vmatprep.subr.mxu0 0.0
  %1378 = vmatpush1.xpose.msra.mxu0 0.0
  %1379 = vmatprep.subr.mxu0 0.0
  %1380 = vmatpush1.xpose.msra.mxu0 0.0
  %1381 = vmatprep.subr.mxu0 0.0
  %1382 = vmatpush1.xpose.msra.mxu0 0.0
  %1383 = vmatprep.subr.mxu0 0.0
  %1384 = vmatpush1.xpose.msra.mxu0 0.0
  %1385 = vmatprep.subr.mxu0 0.0
  %1386 = vmatpush1.xpose.msra.mxu0 0.0
  %1387 = vmatprep.subr.mxu0 0.0
  %1388 = vmatpush1.xpose.msra.mxu0 0.0
  %1389 = vmatprep.subr.mxu0 0.0
  %1390 = vmatpush1.xpose.msra.mxu0 0.0
  %1391 = vmatprep.subr.mxu0 0.0
  %1392 = vmatpush1.xpose.msra.mxu0 0.0
  %1393 = vmatprep.subr.mxu0 0.0
  %1394 = vmatpush1.xpose.msra.mxu0 0.0
  %1395 = vmatprep.subr.mxu0 0.0
  %1396 = vmatpush1.xpose.msra.mxu0 0.0
  %1397 = vmatprep.subr.mxu0 0.0
  %1398 = vmatpush1.xpose.msra.mxu0 0.0
  %1399 = vmatprep.subr.mxu0 0.0
  %1400 = vmatpush1.xpose.msra.mxu0 0.0
  %1401 = vmatprep.subr.mxu0 0.0
  %1402 = vmatpush1.xpose.msra.mxu0 0.0
  %1403 = vmatprep.subr.mxu0 0.0
  %1404 = vmatpush1.xpose.msra.mxu0 0.0
  %1405 = vmatprep.subr.mxu0 0.0
  %1406 = vmatpush1.xpose.msra.mxu0 0.0
  %1407 = vmatprep.subr.mxu0 0.0
  %1408 = vmatpush1.xpose.msra.mxu0 0.0
  %1409 = vmatprep.subr.mxu0 0.0
  %1410 = vmatpush1.xpose.msra.mxu0 0.0
  %1411 = vmatprep.subr.mxu0 0.0
  %1412 = vmatpush1.xpose.msra.mxu0 0.0
  %1413 = vmatprep.subr.mxu0 0.0
  %1414 = vmatpush1.xpose.msra.mxu0 0.0
  %1415 = vmatprep.subr.mxu0 0.0
  %1416 = vmatpush1.xpose.msra.mxu0 0.0
  %1417 = vmatprep.subr.mxu0 0.0
  %1418 = vmatpush1.xpose.msra.mxu0 0.0
  %1419 = vmatprep.subr.mxu0 0.0
  %1420 = vmatpush1.xpose.msra.mxu0 0.0
  %1421 = vmatprep.subr.mxu0 0.0
  %1422 = vmatpush1.xpose.msra.mxu0 0.0
  %1423 = vmatprep.subr.mxu0 0.0
  %1424 = vmatpush1.xpose.msra.mxu0 0.0
  %1425 = vmatprep.subr.mxu0 0.0
  %1426 = vmatpush1.xpose.msra.mxu0 0.0
  %1427 = vmatprep.subr.mxu0 0.0
  %1428 = vmatpush1.xpose.msra.mxu0 0.0
  %1429 = vmatprep.subr.mxu0 0.0
  %1430 = vmatpush1.xpose.msra.mxu0 0.0
  %1431 = vmatprep.mubr.f32.mxu0 0.0
  %1432 = vmatmul.mubr.f32.gmra.mrb[0].mxu0 %v1363
  %v1433 = vpop.f32.mrb[0].mxu0
  %v1434 = vadd.f32 0.0, %v1433
  %v1435 = vpop.f32.mrb[0].mxu0
  %1436 = vdwg.mxu0
  %1437 = vrot.lane.b32.xlu0 %v104, 104
  %v1438 = vpop.permute.xlu0 %1437
  %1439 = vrot.lane.b32.xlu0 %v104, 72
  %v1440 = vpop.permute.xlu0 %1439
  %v1441 = vsel %vm110, %v1438, 0
  %v1443 = vsel %vm110, %v1440, 0
  %1445 = vmatprep.subr.mxu0 0.0
  %1446 = vmatpush1.xpose.msra.mxu0 %v1443
  %1447 = vmatprep.subr.mxu0 0.0
  %1448 = vmatpush1.xpose.msra.mxu0 0.0
  %1449 = vmatprep.subr.mxu0 0.0
  %1450 = vmatpush1.xpose.msra.mxu0 0.0
  %1451 = vmatprep.subr.mxu0 0.0
  %1452 = vmatpush1.xpose.msra.mxu0 0.0
  %1453 = vmatprep.subr.mxu0 0.0
  %1454 = vmatpush1.xpose.msra.mxu0 0.0
  %1455 = vmatprep.subr.mxu0 0.0
  %1456 = vmatpush1.xpose.msra.mxu0 0.0
  %1457 = vmatprep.subr.mxu0 0.0
  %1458 = vmatpush1.xpose.msra.mxu0 0.0
  %1459 = vmatprep.subr.mxu0 0.0
  %1460 = vmatpush1.xpose.msra.mxu0 0.0
  %1461 = vmatprep.subr.mxu0 0.0
  %1462 = vmatpush1.xpose.msra.mxu0 0.0
  %1463 = vmatprep.subr.mxu0 0.0
  %1464 = vmatpush1.xpose.msra.mxu0 0.0
  %1465 = vmatprep.subr.mxu0 0.0
  %1466 = vmatpush1.xpose.msra.mxu0 0.0
  %1467 = vmatprep.subr.mxu0 0.0
  %1468 = vmatpush1.xpose.msra.mxu0 0.0
  %1469 = vmatprep.subr.mxu0 0.0
  %1470 = vmatpush1.xpose.msra.mxu0 0.0
  %1471 = vmatprep.subr.mxu0 0.0
  %1472 = vmatpush1.xpose.msra.mxu0 0.0
  %1473 = vmatprep.subr.mxu0 0.0
  %1474 = vmatpush1.xpose.msra.mxu0 0.0
  %1475 = vmatprep.subr.mxu0 0.0
  %1476 = vmatpush1.xpose.msra.mxu0 0.0
  %1477 = vmatprep.subr.mxu0 0.0
  %1478 = vmatpush1.xpose.msra.mxu0 0.0
  %1479 = vmatprep.subr.mxu0 0.0
  %1480 = vmatpush1.xpose.msra.mxu0 0.0
  %1481 = vmatprep.subr.mxu0 0.0
  %1482 = vmatpush1.xpose.msra.mxu0 0.0
  %1483 = vmatprep.subr.mxu0 0.0
  %1484 = vmatpush1.xpose.msra.mxu0 0.0
  %1485 = vmatprep.subr.mxu0 0.0
  %1486 = vmatpush1.xpose.msra.mxu0 0.0
  %1487 = vmatprep.subr.mxu0 0.0
  %1488 = vmatpush1.xpose.msra.mxu0 0.0
  %1489 = vmatprep.subr.mxu0 0.0
  %1490 = vmatpush1.xpose.msra.mxu0 0.0
  %1491 = vmatprep.subr.mxu0 0.0
  %1492 = vmatpush1.xpose.msra.mxu0 0.0
  %1493 = vmatprep.subr.mxu0 0.0
  %1494 = vmatpush1.xpose.msra.mxu0 0.0
  %1495 = vmatprep.subr.mxu0 0.0
  %1496 = vmatpush1.xpose.msra.mxu0 0.0
  %1497 = vmatprep.subr.mxu0 0.0
  %1498 = vmatpush1.xpose.msra.mxu0 0.0
  %1499 = vmatprep.subr.mxu0 0.0
  %1500 = vmatpush1.xpose.msra.mxu0 0.0
  %1501 = vmatprep.subr.mxu0 0.0
  %1502 = vmatpush1.xpose.msra.mxu0 0.0
  %1503 = vmatprep.subr.mxu0 0.0
  %1504 = vmatpush1.xpose.msra.mxu0 0.0
  %1505 = vmatprep.subr.mxu0 0.0
  %1506 = vmatpush1.xpose.msra.mxu0 0.0
  %1507 = vmatprep.subr.mxu0 0.0
  %1508 = vmatpush1.xpose.msra.mxu0 0.0
  %1509 = vmatprep.mubr.f32.mxu0 0.0
  %1510 = vmatmul.mubr.f32.gmra.mrb[0].mxu0 %v1441
  %v1511 = vpop.f32.mrb[0].mxu0
  %v1512 = vadd.f32 0.0, %v1511
  %v1513 = vpop.f32.mrb[0].mxu0
  %1514 = vdwg.mxu0
  %v1515 = vmul.f32 %v1434, 0.35355338
  %v1516 = vmul.f32 %v1512, 0.35355338
  %v1517 = vsel %vm110, %v1515, -inf
  %1518 = vmax.xlane.f32.xlu0 %v1517
  %v1519 = vpop.xlane.xlu0 %1518
  %v1520 = vsel %vm110, %v1516, -inf
  %1521 = vmax.xlane.f32.xlu0 %v1520
  %v1522 = vpop.xlane.xlu0 %1521
  %v1523 = vsub.f32 %v1515, %v1519
  %v1524 = vsub.f32 %v1516, %v1522
  %v1525 = vmul.f32 %v1523, 1.442695
  %v1526 = vpow.pop %v1525
  %v1527 = vmul.f32 %v1524, 1.442695
  %v1528 = vpow.pop %v1527
  %v1529 = vsel %vm110, %v1526, 0.0
  %1530 = vadd.xlane.f32.xlu0 %v1529
  %v1531 = vpop.xlane.xlu0 %1530
  %v1532 = vsel %vm110, %v1528, 0.0
  %1533 = vadd.xlane.f32.xlu0 %v1532
  %v1534 = vpop.xlane.xlu0 %1533
  %v1535 = vrcp.pop %v1531
  %v1536 = vmul.f32 %v1526, %v1535
  %v1537 = vrcp.pop %v1534
  %v1538 = vmul.f32 %v1528, %v1537
  %1539 = vrot.lane.b32.xlu0 %v99, 40
  %v1540 = vpop.permute.xlu0 %1539
  %v1543 = vsel %vm110, %v1536, 0
  %1545 = vmatprep.subr.mxu0 0.0
  %1546 = vmatpush1.msra.mxu0 %v1540
  %1547 = vmatprep.subr.mxu0 0.0
  %1548 = vmatpush1.msra.mxu0 0.0
  %1549 = vmatprep.subr.mxu0 0.0
  %1550 = vmatpush1.msra.mxu0 0.0
  %1551 = vmatprep.subr.mxu0 0.0
  %1552 = vmatpush1.msra.mxu0 0.0
  %1553 = vmatprep.subr.mxu0 0.0
  %1554 = vmatpush1.msra.mxu0 0.0
  %1555 = vmatprep.subr.mxu0 0.0
  %1556 = vmatpush1.msra.mxu0 0.0
  %1557 = vmatprep.subr.mxu0 0.0
  %1558 = vmatpush1.msra.mxu0 0.0
  %1559 = vmatprep.subr.mxu0 0.0
  %1560 = vmatpush1.msra.mxu0 0.0
  %1561 = vmatprep.subr.mxu0 0.0
  %1562 = vmatpush1.msra.mxu0 0.0
  %1563 = vmatprep.subr.mxu0 0.0
  %1564 = vmatpush1.msra.mxu0 0.0
  %1565 = vmatprep.subr.mxu0 0.0
  %1566 = vmatpush1.msra.mxu0 0.0
  %1567 = vmatprep.subr.mxu0 0.0
  %1568 = vmatpush1.msra.mxu0 0.0
  %1569 = vmatprep.subr.mxu0 0.0
  %1570 = vmatpush1.msra.mxu0 0.0
  %1571 = vmatprep.subr.mxu0 0.0
  %1572 = vmatpush1.msra.mxu0 0.0
  %1573 = vmatprep.subr.mxu0 0.0
  %1574 = vmatpush1.msra.mxu0 0.0
  %1575 = vmatprep.subr.mxu0 0.0
  %1576 = vmatpush1.msra.mxu0 0.0
  %1577 = vmatprep.subr.mxu0 0.0
  %1578 = vmatpush1.msra.mxu0 0.0
  %1579 = vmatprep.subr.mxu0 0.0
  %1580 = vmatpush1.msra.mxu0 0.0
  %1581 = vmatprep.subr.mxu0 0.0
  %1582 = vmatpush1.msra.mxu0 0.0
  %1583 = vmatprep.subr.mxu0 0.0
  %1584 = vmatpush1.msra.mxu0 0.0
  %1585 = vmatprep.subr.mxu0 0.0
  %1586 = vmatpush1.msra.mxu0 0.0
  %1587 = vmatprep.subr.mxu0 0.0
  %1588 = vmatpush1.msra.mxu0 0.0
  %1589 = vmatprep.subr.mxu0 0.0
  %1590 = vmatpush1.msra.mxu0 0.0
  %1591 = vmatprep.subr.mxu0 0.0
  %1592 = vmatpush1.msra.mxu0 0.0
  %1593 = vmatprep.subr.mxu0 0.0
  %1594 = vmatpush1.msra.mxu0 0.0
  %1595 = vmatprep.subr.mxu0 0.0
  %1596 = vmatpush1.msra.mxu0 0.0
  %1597 = vmatprep.subr.mxu0 0.0
  %1598 = vmatpush1.msra.mxu0 0.0
  %1599 = vmatprep.subr.mxu0 0.0
  %1600 = vmatpush1.msra.mxu0 0.0
  %1601 = vmatprep.subr.mxu0 0.0
  %1602 = vmatpush1.msra.mxu0 0.0
  %1603 = vmatprep.subr.mxu0 0.0
  %1604 = vmatpush1.msra.mxu0 0.0
  %1605 = vmatprep.subr.mxu0 0.0
  %1606 = vmatpush1.msra.mxu0 0.0
  %1607 = vmatprep.subr.mxu0 0.0
  %1608 = vmatpush1.msra.mxu0 0.0
  %1609 = vmatprep.mubr.f32.mxu0 0.0
  %1610 = vmatmul.mubr.f32.gmra.mrb[0].mxu0 %v1543
  %v1611 = vpop.f32.mrb[0].mxu0
  %v1612 = vadd.f32 0.0, %v1611
  %v1613 = vpop.f32.mrb[0].mxu0
  %1614 = vdwg.mxu0
  %1615 = vrot.lane.b32.xlu0 %v104, 40
  %v1616 = vpop.permute.xlu0 %1615
  %v1619 = vsel %vm110, %v1538, 0
  %1621 = vmatprep.subr.mxu0 0.0
  %1622 = vmatpush1.msra.mxu0 %v1616
  %1623 = vmatprep.subr.mxu0 0.0
  %1624 = vmatpush1.msra.mxu0 0.0
  %1625 = vmatprep.subr.mxu0 0.0
  %1626 = vmatpush1.msra.mxu0 0.0
  %1627 = vmatprep.subr.mxu0 0.0
  %1628 = vmatpush1.msra.mxu0 0.0
  %1629 = vmatprep.subr.mxu0 0.0
  %1630 = vmatpush1.msra.mxu0 0.0
  %1631 = vmatprep.subr.mxu0 0.0
  %1632 = vmatpush1.msra.mxu0 0.0
  %1633 = vmatprep.subr.mxu0 0.0
  %1634 = vmatpush1.msra.mxu0 0.0
  %1635 = vmatprep.subr.mxu0 0.0
  %1636 = vmatpush1.msra.mxu0 0.0
  %1637 = vmatprep.subr.mxu0 0.0
  %1638 = vmatpush1.msra.mxu0 0.0
  %1639 = vmatprep.subr.mxu0 0.0
  %1640 = vmatpush1.msra.mxu0 0.0
  %1641 = vmatprep.subr.mxu0 0.0
  %1642 = vmatpush1.msra.mxu0 0.0
  %1643 = vmatprep.subr.mxu0 0.0
  %1644 = vmatpush1.msra.mxu0 0.0
  %1645 = vmatprep.subr.mxu0 0.0
  %1646 = vmatpush1.msra.mxu0 0.0
  %1647 = vmatprep.subr.mxu0 0.0
  %1648 = vmatpush1.msra.mxu0 0.0
  %1649 = vmatprep.subr.mxu0 0.0
  %1650 = vmatpush1.msra.mxu0 0.0
  %1651 = vmatprep.subr.mxu0 0.0
  %1652 = vmatpush1.msra.mxu0 0.0
  %1653 = vmatprep.subr.mxu0 0.0
  %1654 = vmatpush1.msra.mxu0 0.0
  %1655 = vmatprep.subr.mxu0 0.0
  %1656 = vmatpush1.msra.mxu0 0.0
  %1657 = vmatprep.subr.mxu0 0.0
  %1658 = vmatpush1.msra.mxu0 0.0
  %1659 = vmatprep.subr.mxu0 0.0
  %1660 = vmatpush1.msra.mxu0 0.0
  %1661 = vmatprep.subr.mxu0 0.0
  %1662 = vmatpush1.msra.mxu0 0.0
  %1663 = vmatprep.subr.mxu0 0.0
  %1664 = vmatpush1.msra.mxu0 0.0
  %1665 = vmatprep.subr.mxu0 0.0
  %1666 = vmatpush1.msra.mxu0 0.0
  %1667 = vmatprep.subr.mxu0 0.0
  %1668 = vmatpush1.msra.mxu0 0.0
  %1669 = vmatprep.subr.mxu0 0.0
  %1670 = vmatpush1.msra.mxu0 0.0
  %1671 = vmatprep.subr.mxu0 0.0
  %1672 = vmatpush1.msra.mxu0 0.0
  %1673 = vmatprep.subr.mxu0 0.0
  %1674 = vmatpush1.msra.mxu0 0.0
  %1675 = vmatprep.subr.mxu0 0.0
  %1676 = vmatpush1.msra.mxu0 0.0
  %1677 = vmatprep.subr.mxu0 0.0
  %1678 = vmatpush1.msra.mxu0 0.0
  %1679 = vmatprep.subr.mxu0 0.0
  %1680 = vmatpush1.msra.mxu0 0.0
  %1681 = vmatprep.subr.mxu0 0.0
  %1682 = vmatpush1.msra.mxu0 0.0
  %1683 = vmatprep.subr.mxu0 0.0
  %1684 = vmatpush1.msra.mxu0 0.0
  %1685 = vmatprep.mubr.f32.mxu0 0.0
  %1686 = vmatmul.mubr.f32.gmra.mrb[0].mxu0 %v1619
  %v1687 = vpop.f32.mrb[0].mxu0
  %v1688 = vadd.f32 0.0, %v1687
  %v1689 = vpop.f32.mrb[0].mxu0
  %1690 = vdwg.mxu0
  %1692 = vrot.lane.b32.xlu0 %v19, 32
  %v1693 = vpop.permute.xlu0 %1692
  %v1696 = vsel %vm110, %v1612, 0
  %v1699 = vsel %vm110, %v1688, 0
  %1701 = vmatprep.subr.mxu0 0.0
  %1702 = vmatpush1.msra.mxu0 %v1693
  %1703 = vmatprep.subr.mxu0 0.0
  %1704 = vmatpush1.msra.mxu0 0.0
  %1705 = vmatprep.subr.mxu0 0.0
  %1706 = vmatpush1.msra.mxu0 0.0
  %1707 = vmatprep.subr.mxu0 0.0
  %1708 = vmatpush1.msra.mxu0 0.0
  %1709 = vmatprep.subr.mxu0 0.0
  %1710 = vmatpush1.msra.mxu0 0.0
  %1711 = vmatprep.subr.mxu0 0.0
  %1712 = vmatpush1.msra.mxu0 0.0
  %1713 = vmatprep.subr.mxu0 0.0
  %1714 = vmatpush1.msra.mxu0 0.0
  %1715 = vmatprep.subr.mxu0 0.0
  %1716 = vmatpush1.msra.mxu0 0.0
  %1717 = vmatprep.subr.mxu0 0.0
  %1718 = vmatpush1.msra.mxu0 0.0
  %1719 = vmatprep.subr.mxu0 0.0
  %1720 = vmatpush1.msra.mxu0 0.0
  %1721 = vmatprep.subr.mxu0 0.0
  %1722 = vmatpush1.msra.mxu0 0.0
  %1723 = vmatprep.subr.mxu0 0.0
  %1724 = vmatpush1.msra.mxu0 0.0
  %1725 = vmatprep.subr.mxu0 0.0
  %1726 = vmatpush1.msra.mxu0 0.0
  %1727 = vmatprep.subr.mxu0 0.0
  %1728 = vmatpush1.msra.mxu0 0.0
  %1729 = vmatprep.subr.mxu0 0.0
  %1730 = vmatpush1.msra.mxu0 0.0
  %1731 = vmatprep.subr.mxu0 0.0
  %1732 = vmatpush1.msra.mxu0 0.0
  %1733 = vmatprep.subr.mxu0 0.0
  %1734 = vmatpush1.msra.mxu0 0.0
  %1735 = vmatprep.subr.mxu0 0.0
  %1736 = vmatpush1.msra.mxu0 0.0
  %1737 = vmatprep.subr.mxu0 0.0
  %1738 = vmatpush1.msra.mxu0 0.0
  %1739 = vmatprep.subr.mxu0 0.0
  %1740 = vmatpush1.msra.mxu0 0.0
  %1741 = vmatprep.subr.mxu0 0.0
  %1742 = vmatpush1.msra.mxu0 0.0
  %1743 = vmatprep.subr.mxu0 0.0
  %1744 = vmatpush1.msra.mxu0 0.0
  %1745 = vmatprep.subr.mxu0 0.0
  %1746 = vmatpush1.msra.mxu0 0.0
  %1747 = vmatprep.subr.mxu0 0.0
  %1748 = vmatpush1.msra.mxu0 0.0
  %1749 = vmatprep.subr.mxu0 0.0
  %1750 = vmatpush1.msra.mxu0 0.0
  %1751 = vmatprep.subr.mxu0 0.0
  %1752 = vmatpush1.msra.mxu0 0.0
  %1753 = vmatprep.subr.mxu0 0.0
  %1754 = vmatpush1.msra.mxu0 0.0
  %1755 = vmatprep.subr.mxu0 0.0
  %1756 = vmatpush1.msra.mxu0 0.0
  %1757 = vmatprep.subr.mxu0 0.0
  %1758 = vmatpush1.msra.mxu0 0.0
  %1759 = vmatprep.subr.mxu0 0.0
  %1760 = vmatpush1.msra.mxu0 0.0
  %1761 = vmatprep.subr.mxu0 0.0
  %1762 = vmatpush1.msra.mxu0 0.0
  %1763 = vmatprep.subr.mxu0 0.0
  %1764 = vmatpush1.msra.mxu0 0.0
  %1765 = vmatprep.mubr.f32.mxu0 0.0
  %1766 = vmatmul.mubr.f32.gmra.mrb[0].mxu0 %v1696
  %v1767 = vpop.f32.mrb[0].mxu0
  %v1768 = vadd.f32 0.0, %v1767
  %v1769 = vpop.f32.mrb[0].mxu0
  %1770 = vmatprep.mubr.f32.mxu0 0.0
  %1771 = vmatmul.mubr.f32.gmra.mrb[0].mxu0 %v1699
  %v1772 = vpop.f32.mrb[0].mxu0
  %v1773 = vadd.f32 0.0, %v1772
  %v1774 = vpop.f32.mrb[0].mxu0
  %1775 = vdwg.mxu0
  %v1776 = vadd.f32 %v1357, %v1768
  %v1777 = vadd.f32 %v1358, %v1773
  %v1778 = vlaneseq
  %v1779 = vshrl.u32 %v1778, 7
  %v1780 = vsub.s32 1, %v1779
  %v1781 = vrot.slane %v20, %v1780
  %v1782 = vadd.f32 %v1776, %v1781
  %v1783 = vadd.f32 %v1777, %v1781
  %v1784 = vadd.f32 %v14, %v1782
  %v1785 = vadd.f32 %v15, %v1783
  %v1786 = vsel %vm25, %v1784, 0.0
  %1787 = vadd.xlane.f32.xlu0 %v1786
  %v1788 = vpop.xlane.xlu0 %1787
  %v1789 = vsel %vm25, %v1785, 0.0
  %1790 = vadd.xlane.f32.xlu0 %v1789
  %v1791 = vpop.xlane.xlu0 %1790
  %v1792 = vrcp.pop 32.0
  %v1793 = vmul.f32 %v1788, %v1792
  %v1794 = vmul.f32 %v1791, %v1792
  %v1795 = vsub.f32 %v1784, %v1793
  %v1796 = vsub.f32 %v1785, %v1794
  %v1797 = vmul.f32 %v1795, %v1795
  %v1798 = vmul.f32 %v1796, %v1796
  %v1799 = vsel %vm25, %v1797, 0.0
  %1800 = vadd.xlane.f32.xlu0 %v1799
  %v1801 = vpop.xlane.xlu0 %1800
  %v1802 = vsel %vm25, %v1798, 0.0
  %1803 = vadd.xlane.f32.xlu0 %v1802
  %v1804 = vpop.xlane.xlu0 %1803
  %v1805 = vmul.f32 %v1801, %v1792
  %v1806 = vmul.f32 %v1804, %v1792
  %v1807 = vadd.f32 %v1805, 1e-05
  %v1808 = vadd.f32 %v1806, 1e-05
  %v1809 = vrsqrt.pop %v1807
  %v1810 = vrsqrt.pop %v1808
  %v1811 = vmul.f32 %v1795, %v1809
  %v1812 = vmul.f32 %v1796, %v1810
  %1814 = vrot.lane.b32.xlu0 %v1781, 96
  %v1815 = vpop.permute.xlu0 %1814
  %v1817 = vmul.f32 %v1811, %v1815
  %v1818 = vmul.f32 %v1812, %v1815
  %1819 = vrot.lane.b32.xlu0 %v1781, 64
  %v1820 = vpop.permute.xlu0 %1819
  %v1822 = vadd.f32 %v1817, %v1820
  %v1823 = vadd.f32 %v1818, %v1820
  %1824 = vst.msk [vmem:[%s3] sm:$0xff] %vm25, %v1822
  %1825 = vst.msk [vmem:[%s3 + $0x8] sm:$0xff] %vm25, %v1823
  // Predicated region
  $region14: #{cross_head_attention.1} parent=0 // pred_check
    _
  $region15: #{cross_head_attention.1} parent=0 // pred_check_branch
    %1827 = sbr.rel (0) target = $region17
  $region16: #{cross_head_attention.1} parent=0 // pred_region
    _
  $region17: #{cross_head_attention.1} parent=0 // pred_fallthru
    _
  // Predicated region
  $region18: #{cross_head_attention.1} parent=0 // pred_check
    _
  $region19: #{cross_head_attention.1} parent=0 // pred_check_branch
    %1829 = sbr.rel (0) target = $region21
  $region20: #{cross_head_attention.1} parent=0 // pred_region
    _
  $region21: #{cross_head_attention.1} parent=0 // pred_fallthru
    _

</llo_original>
